<compile_context>
chip_gen: v7x
topology: tpu7x:2x2x1
jax: 0.10.0
libtpu: 0.0.40
codegen_flags: <defaults>
</compile_context>

<pallas_src>
import jax
import jax.numpy as jnp
from jax.experimental import pallas as pl
from jax.experimental.pallas import tpu as pltpu

# Deterministic "config.rl" values (buffers of the PyTorch module).
CLIP_COEF = 0.2
ENT_COEF = 0.01
VF_COEF = 0.5
CLIP_VLOSS = True
NORM_ADV = True

LANE = 128


def _round_up(x, m):
    return ((x + m - 1) // m) * m


def _has_big_vmem():
    """v4/v5/v6 chips have 128 MiB VMEM; v7x only 64 MiB per TensorCore."""
    try:
        kind = jax.devices()[0].device_kind.lower()
        return ("v4" in kind) or ("v5" in kind) or ("v6" in kind)
    except Exception:
        return False


_BIG_VMEM = _has_big_vmem()
# Row caps per block (block bytes per f32 input = tile_r * 128 * 4).
_TILE1_CAP = 4096 if _BIG_VMEM else 2048       # pass 1: 2 MiB / 1 MiB per input
_TILE2_CAP = 8192 if _BIG_VMEM else 4096       # pass 2: 4 MiB / 2 MiB per input
_VMEM_LIMIT = (48 if _BIG_VMEM else 36) * 1024 * 1024


def _pick_tile(rows, min_blocks, cap):
    """Largest multiple-of-32 row tile (<= cap, <= rows) giving >= min_blocks."""
    if rows <= 32:
        return rows                       # single block covering the full dim
    return min(cap, max(32, _round_up(pl.cdiv(rows, min_blocks), 32)))


def _dense_partial(row_sums):
    """Build an (8, LANE) tile from <=8 (1, LANE) row sums with one dense store
    in mind: sublane-select instead of masked single-row stores."""
    sub = jax.lax.broadcasted_iota(jnp.int32, (8, LANE), 0)
    acc = jnp.zeros((8, LANE), jnp.float32)
    for k, s in enumerate(row_sums):
        acc = jnp.where(sub == k, s, acc)
    return acc


def _valid_mask(n, tile_r):
    """Flat-index < n validity mask for the current (tile_r, LANE) block."""
    base = pl.program_id(0) * (tile_r * LANE)
    ridx = jax.lax.broadcasted_iota(jnp.int32, (tile_r, LANE), 0)
    lidx = jax.lax.broadcasted_iota(jnp.int32, (tile_r, LANE), 1)
    return (base + ridx * LANE + lidx) < n


# ---------------------------------------------------------------------------
# Pass 1: clipfrac mask + all linear statistics (per-block partial sums).
# ---------------------------------------------------------------------------
def _make_stats_kernel(n, tile_r, masked):
    def kernel(adv0_ref, ret_ref, val_ref, adv_ref, logp_ref, newlogp_ref,
               ent_ref, newv_ref, clip_ref, part_ref):
        ret = ret_ref[...]
        val = val_ref[...]
        adv = adv_ref[...]
        logp = logp_ref[...]
        newlogp = newlogp_ref[...]
        ent = ent_ref[...]
        newv = newv_ref[...]

        logratio = newlogp - logp
        ratio = jnp.exp(logratio)

        # Clipfrac mask written as int8 (1 B/elem) -- the only large write.
        clip_ref[...] = (jnp.abs(ratio - 1.0) > CLIP_COEF).astype(jnp.int8)

        if CLIP_VLOSS:
            v_un = (newv - ret) ** 2
            v_cl = (val + jnp.clip(newv - val, -CLIP_COEF, CLIP_COEF) - ret) ** 2
            v_term = jnp.maximum(v_un, v_cl)
        else:
            v_term = (newv - ret) ** 2

        # Shifted advantage (d = adv - adv[0]) for a cancellation-safe variance.
        d = adv - adv0_ref[0]

        quantities = (logratio, ratio, d, d * d, ent, v_term)

        if masked:
            # Grid over-covers the (rows, LANE) view (clipped last block and/or
            # zero-padded last row): zero out invalid positions before summing.
            valid = _valid_mask(n, tile_r)
            quantities = tuple(jnp.where(valid, q, 0.0) for q in quantities)

        row_sums = [jnp.sum(q, axis=0, keepdims=True) for q in quantities]
        part_ref[...] = _dense_partial(row_sums)   # rows 6..7 stay zero/padding

    return kernel


# ---------------------------------------------------------------------------
# Pass 2: policy-gradient loss (needs global adv mean / std from pass 1).
# ---------------------------------------------------------------------------
def _make_pg_kernel(n, tile_r, masked):
    def kernel(scal_ref, adv_ref, logp_ref, newlogp_ref, part_ref):
        adv = (adv_ref[...] - scal_ref[0]) * scal_ref[1]
        ratio = jnp.exp(newlogp_ref[...] - logp_ref[...])
        pg1 = -adv * ratio
        pg2 = -adv * jnp.clip(ratio, 1.0 - CLIP_COEF, 1.0 + CLIP_COEF)
        pg = jnp.maximum(pg1, pg2)

        if masked:
            pg = jnp.where(_valid_mask(n, tile_r), pg, 0.0)

        part_ref[...] = _dense_partial([jnp.sum(pg, axis=0, keepdims=True)])

    return kernel


def ppo_loss(b_returns, b_values, b_advantages, b_logprobs, newlogprob,
             entropy, newvalue):
    flats = [jnp.asarray(a).reshape(-1).astype(jnp.float32)
             for a in (b_returns, b_values, b_advantages, b_logprobs,
                       newlogprob, entropy, newvalue)]
    n = flats[0].shape[0]
    rows = pl.cdiv(n, LANE)
    pad = rows * LANE - n          # < 128; only non-zero when n % 128 != 0

    def to2d(x):
        if pad:
            x = jnp.concatenate([x, jnp.zeros((pad,), jnp.float32)])
        return x.reshape(rows, LANE)          # free bitcast when pad == 0

    mats = [to2d(x) for x in flats]
    cparams = pltpu.CompilerParams(dimension_semantics=("parallel",),
                                   vmem_limit_bytes=_VMEM_LIMIT)

    # ---- pass 1: streaming statistics + clipfrac mask ---------------------
    tile1 = _pick_tile(rows, 4, _TILE1_CAP)
    nblk1 = pl.cdiv(rows, tile1)
    masked1 = (nblk1 * tile1 * LANE) != n
    adv0 = flats[2][:1]                       # variance shift, SMEM (1,)

    row1 = pl.BlockSpec((tile1, LANE), lambda i: (i, 0))
    part_spec1 = pl.BlockSpec((None, 8, LANE), lambda i: (i, 0, 0))

    clip_i8, parts1 = pl.pallas_call(
        _make_stats_kernel(n, tile1, masked1),
        grid=(nblk1,),
        in_specs=[pl.BlockSpec(memory_space=pltpu.SMEM)] + [row1] * 7,
        out_specs=(row1, part_spec1),
        out_shape=(jax.ShapeDtypeStruct((rows, LANE), jnp.int8),
                   jax.ShapeDtypeStruct((nblk1, 8, LANE), jnp.float32)),
        compiler_params=cparams,
        cost_estimate=pl.CostEstimate(
            flops=25 * rows * LANE, transcendentals=rows * LANE,
            bytes_accessed=29 * rows * LANE + nblk1 * 8 * LANE * 4),
    )(adv0, *mats)

    sums = jnp.sum(parts1[:, :6, :], axis=(0, 2))       # tiny combine in XLA
    s_lr, s_r, s_d, s_dd, s_ent, s_v = (sums[i] for i in range(6))
    inv_n = 1.0 / n
    old_approx_kl = -s_lr * inv_n
    approx_kl = (s_r - s_lr) * inv_n - 1.0
    entropy_loss = s_ent * inv_n
    v_loss = 0.5 * s_v * inv_n

    if NORM_ADV:
        mean_d = s_d * inv_n
        adv_mean = adv0[0] + mean_d
        # Bessel-corrected variance from shifted sums (cancellation-safe).
        adv_var = (s_dd - n * mean_d * mean_d) / max(n - 1, 1)
        adv_std = jnp.sqrt(jnp.maximum(adv_var, 0.0))
        adv_scale = 1.0 / (adv_std + 1e-8)
    else:
        adv_mean = jnp.float32(0.0)
        adv_scale = jnp.float32(1.0)
    scal = jnp.stack([adv_mean, adv_scale]).astype(jnp.float32)   # SMEM (2,)

    # ---- pass 2: pg loss (re-reads adv / logp / newlogprob) ---------------
    tile2 = _pick_tile(rows, 2, _TILE2_CAP)
    nblk2 = pl.cdiv(rows, tile2)
    masked2 = (nblk2 * tile2 * LANE) != n
    row2 = pl.BlockSpec((tile2, LANE), lambda i: (i, 0))
    part_spec2 = pl.BlockSpec((None, 8, LANE), lambda i: (i, 0, 0))

    parts2 = pl.pallas_call(
        _make_pg_kernel(n, tile2, masked2),
        grid=(nblk2,),
        in_specs=[pl.BlockSpec(memory_space=pltpu.SMEM), row2, row2, row2],
        out_specs=part_spec2,
        out_shape=jax.ShapeDtypeStruct((nblk2, 8, LANE), jnp.float32),
        compiler_params=cparams,
        cost_estimate=pl.CostEstimate(
            flops=10 * rows * LANE, transcendentals=rows * LANE,
            bytes_accessed=12 * rows * LANE + nblk2 * 8 * LANE * 4 + 8),
    )(scal, mats[2], mats[3], mats[4])

    pg_loss = jnp.sum(parts2[:, 0, :]) * inv_n

    loss = pg_loss - ENT_COEF * entropy_loss + VF_COEF * v_loss
    clipfracs = clip_i8.reshape(-1)[:n].astype(jnp.bool_)
    return (loss, pg_loss, v_loss, entropy_loss, approx_kl, old_approx_kl,
            clipfracs)


def _ppo_loss_ref(b_returns, b_values, b_advantages, b_logprobs, newlogprob,
                  entropy, newvalue):
    """Pure-JAX reference mirroring the PyTorch module."""
    newvalue = newvalue.reshape(-1)
    logratio = newlogprob - b_logprobs
    ratio = jnp.exp(logratio)
    old_approx_kl = jnp.mean(-logratio)
    approx_kl = jnp.mean(ratio - 1.0 - logratio)
    clipfracs = jnp.abs(ratio - 1.0) > CLIP_COEF
    adv = b_advantages
    if NORM_ADV:
        adv = (adv - adv.mean()) / (jnp.std(adv, ddof=1) + 1e-8)
    pg_loss = jnp.mean(jnp.maximum(
        -adv * ratio, -adv * jnp.clip(ratio, 1 - CLIP_COEF, 1 + CLIP_COEF)))
    if CLIP_VLOSS:
        v_un = (newvalue - b_returns) ** 2
        v_cl = (b_values + jnp.clip(newvalue - b_values, -CLIP_COEF, CLIP_COEF)
                - b_returns) ** 2
        v_loss = 0.5 * jnp.mean(jnp.maximum(v_un, v_cl))
    else:
        v_loss = 0.5 * jnp.mean((newvalue - b_returns) ** 2)
    entropy_loss = entropy.mean()
    loss = pg_loss - ENT_COEF * entropy_loss + VF_COEF * v_loss
    return loss, pg_loss, v_loss, entropy_loss, approx_kl, old_approx_kl, clipfracs


# TODO(synk): update()/update_critic()/behavior_clone_actor() (autograd,
# optimizer step, grad-norm clipping) are training plumbing, not part of the
# forward pass, and are not implemented here.

if __name__ == "__main__":
    ppo = jax.jit(ppo_loss)
    for n in (16384, 5000):   # lane-aligned (zero-copy) case and ragged case
        keys = jax.random.split(jax.random.PRNGKey(0), 7)
        b_returns = jax.random.normal(keys[0], (n,), jnp.float32)
        b_values = jax.random.normal(keys[1], (n,), jnp.float32)
        b_advantages = 0.3 + jax.random.normal(keys[2], (n,), jnp.float32)
        b_logprobs = -jnp.abs(jax.random.normal(keys[3], (n,), jnp.float32))
        newlogprob = b_logprobs + 0.1 * jax.random.normal(keys[4], (n,), jnp.float32)
        entropy = jnp.abs(jax.random.normal(keys[5], (n,), jnp.float32))
        newvalue = jax.random.normal(keys[6], (n, 1), jnp.float32)  # exercises view(-1)

        out = jax.block_until_ready(
            ppo(b_returns, b_values, b_advantages, b_logprobs, newlogprob,
                entropy, newvalue))
        ref = _ppo_loss_ref(b_returns, b_values, b_advantages, b_logprobs,
                            newlogprob, entropy, newvalue)
        for got, want in zip(out[:6], ref[:6]):
            assert jnp.allclose(got, want, rtol=2e-4, atol=2e-5), (n, got, want)
        assert out[6].shape == (n,) and out[6].dtype == jnp.bool_
        # clipfrac mask: allow a couple of threshold-ulp flips between the
        # Pallas exp and the XLA exp.
        mismatches = int(jnp.sum(out[6] != ref[6]))
        assert mismatches <= 2, (n, mismatches)

    print("KERNEL_OK")
</pallas_src>

<mosaic_0001>
module attributes {stable_mosaic.version = 11 : i64} {
  func.func @kernel(%arg0: i32, %arg1: memref<1xf32, #tpu.memory_space<smem>>, %arg2: memref<32x128xf32, #tpu.memory_space<vmem>>, %arg3: memref<32x128xf32, #tpu.memory_space<vmem>>, %arg4: memref<32x128xf32, #tpu.memory_space<vmem>>, %arg5: memref<32x128xf32, #tpu.memory_space<vmem>>, %arg6: memref<32x128xf32, #tpu.memory_space<vmem>>, %arg7: memref<32x128xf32, #tpu.memory_space<vmem>>, %arg8: memref<32x128xf32, #tpu.memory_space<vmem>>, %arg9: memref<32x128xi8, #tpu.memory_space<vmem>>, %arg10: memref<1x8x128xf32, #tpu.memory_space<vmem>>) attributes {dimension_semantics = [#tpu.dimension_semantics<parallel>], iteration_bounds = array<i64: 4>, scalar_prefetch = 0 : i64, scratch_operands = 0 : i64, tpu.core_type = #tpu.core_type<tc>, window_params = [{transform_indices = @transform_0, window_bounds = array<i64: 1>}, {transform_indices = @transform_1, window_bounds = array<i64: 32, 128>}, {transform_indices = @transform_2, window_bounds = array<i64: 32, 128>}, {transform_indices = @transform_3, window_bounds = array<i64: 32, 128>}, {transform_indices = @transform_4, window_bounds = array<i64: 32, 128>}, {transform_indices = @transform_5, window_bounds = array<i64: 32, 128>}, {transform_indices = @transform_6, window_bounds = array<i64: 32, 128>}, {transform_indices = @transform_7, window_bounds = array<i64: 32, 128>}, {transform_indices = @transform_8, window_bounds = array<i64: 32, 128>}, {transform_indices = @transform_9, window_bounds = array<i64: 1, 8, 128>}]} {
    %c0 = arith.constant 0 : index
    %c0_0 = arith.constant 0 : index
    %0 = vector.load %arg2[%c0, %c0_0] : memref<32x128xf32, #tpu.memory_space<vmem>>, vector<32x128xf32>
    %c0_1 = arith.constant 0 : index
    %c0_2 = arith.constant 0 : index
    %1 = vector.load %arg3[%c0_1, %c0_2] : memref<32x128xf32, #tpu.memory_space<vmem>>, vector<32x128xf32>
    %c0_3 = arith.constant 0 : index
    %c0_4 = arith.constant 0 : index
    %2 = vector.load %arg4[%c0_3, %c0_4] : memref<32x128xf32, #tpu.memory_space<vmem>>, vector<32x128xf32>
    %c0_5 = arith.constant 0 : index
    %c0_6 = arith.constant 0 : index
    %3 = vector.load %arg5[%c0_5, %c0_6] : memref<32x128xf32, #tpu.memory_space<vmem>>, vector<32x128xf32>
    %c0_7 = arith.constant 0 : index
    %c0_8 = arith.constant 0 : index
    %4 = vector.load %arg6[%c0_7, %c0_8] : memref<32x128xf32, #tpu.memory_space<vmem>>, vector<32x128xf32>
    %c0_9 = arith.constant 0 : index
    %c0_10 = arith.constant 0 : index
    %5 = vector.load %arg7[%c0_9, %c0_10] : memref<32x128xf32, #tpu.memory_space<vmem>>, vector<32x128xf32>
    %c0_11 = arith.constant 0 : index
    %c0_12 = arith.constant 0 : index
    %6 = vector.load %arg8[%c0_11, %c0_12] : memref<32x128xf32, #tpu.memory_space<vmem>>, vector<32x128xf32>
    %7 = arith.subf %4, %3 : vector<32x128xf32>
    %8 = math.exp %7 : vector<32x128xf32>
    %cst = arith.constant 1.000000e+00 : f32
    %9 = vector.broadcast %cst : f32 to vector<32x128xf32>
    %10 = arith.subf %8, %9 : vector<32x128xf32>
    %11 = math.absf %10 : vector<32x128xf32>
    %cst_13 = arith.constant 2.000000e-01 : f32
    %12 = vector.broadcast %cst_13 : f32 to vector<32x128xf32>
    %13 = arith.cmpf ogt, %11, %12 : vector<32x128xf32>
    %14 = arith.extui %13 : vector<32x128xi1> to vector<32x128xi8>
    %c0_14 = arith.constant 0 : index
    %c0_15 = arith.constant 0 : index
    %15 = vector.load %arg9[%c0_14, %c0_15] : memref<32x128xi8, #tpu.memory_space<vmem>>, vector<32x128xi8>
    tpu.vector_store %arg9[%c0_14, %c0_15], %14 {strides = array<i32>} : memref<32x128xi8, #tpu.memory_space<vmem>>, vector<32x128xi8>,
    %16 = arith.subf %6, %0 : vector<32x128xf32>
    %17 = arith.mulf %16, %16 : vector<32x128xf32>
    %18 = arith.subf %6, %1 : vector<32x128xf32>
    %cst_16 = arith.constant -2.000000e-01 : f32
    %cst_17 = arith.constant 2.000000e-01 : f32
    %19 = vector.broadcast %cst_16 : f32 to vector<32x128xf32>
    %20 = arith.maximumf %19, %18 : vector<32x128xf32>
    %21 = vector.broadcast %cst_17 : f32 to vector<32x128xf32>
    %22 = arith.minimumf %21, %20 : vector<32x128xf32>
    %23 = arith.addf %1, %22 : vector<32x128xf32>
    %24 = arith.subf %23, %0 : vector<32x128xf32>
    %25 = arith.mulf %24, %24 : vector<32x128xf32>
    %26 = arith.maximumf %17, %25 : vector<32x128xf32>
    %c0_18 = arith.constant 0 : index
    %27 = memref.load %arg1[%c0_18] : memref<1xf32, #tpu.memory_space<smem>>
    %28 = vector.broadcast %27 : f32 to vector<32x128xf32>
    %29 = arith.subf %2, %28 : vector<32x128xf32>
    %30 = arith.mulf %29, %29 : vector<32x128xf32>
    %cst_19 = arith.constant dense<0.000000e+00> : vector<128xf32>
    %31 = vector.multi_reduction <add>, %7, %cst_19 [0] : vector<32x128xf32> to vector<128xf32>
    %32 = vector.shape_cast %31 : vector<128xf32> to vector<1x128xf32>
    %cst_20 = arith.constant dense<0.000000e+00> : vector<128xf32>
    %33 = vector.multi_reduction <add>, %8, %cst_20 [0] : vector<32x128xf32> to vector<128xf32>
    %34 = vector.shape_cast %33 : vector<128xf32> to vector<1x128xf32>
    %cst_21 = arith.constant dense<0.000000e+00> : vector<128xf32>
    %35 = vector.multi_reduction <add>, %29, %cst_21 [0] : vector<32x128xf32> to vector<128xf32>
    %36 = vector.shape_cast %35 : vector<128xf32> to vector<1x128xf32>
    %cst_22 = arith.constant dense<0.000000e+00> : vector<128xf32>
    %37 = vector.multi_reduction <add>, %30, %cst_22 [0] : vector<32x128xf32> to vector<128xf32>
    %38 = vector.shape_cast %37 : vector<128xf32> to vector<1x128xf32>
    %cst_23 = arith.constant dense<0.000000e+00> : vector<128xf32>
    %39 = vector.multi_reduction <add>, %5, %cst_23 [0] : vector<32x128xf32> to vector<128xf32>
    %40 = vector.shape_cast %39 : vector<128xf32> to vector<1x128xf32>
    %cst_24 = arith.constant dense<0.000000e+00> : vector<128xf32>
    %41 = vector.multi_reduction <add>, %26, %cst_24 [0] : vector<32x128xf32> to vector<128xf32>
    %42 = vector.shape_cast %41 : vector<128xf32> to vector<1x128xf32>
    %43 = tpu.iota {dimensions = array<i32: 0>} : vector<8x128xi32>
    %cst_25 = arith.constant 0.000000e+00 : f32
    %44 = vector.broadcast %cst_25 : f32 to vector<8x128xf32>
    %c0_i32 = arith.constant 0 : i32
    %45 = vector.broadcast %c0_i32 : i32 to vector<8x128xi32>
    %46 = arith.cmpi eq, %43, %45 : vector<8x128xi32>
    %47 = vector.shape_cast %32 : vector<1x128xf32> to vector<1x128xf32>
    %48 = vector.broadcast %47 : vector<1x128xf32> to vector<8x128xf32>
    %49 = arith.select %46, %48, %44 : vector<8x128xi1>, vector<8x128xf32>
    %c1_i32 = arith.constant 1 : i32
    %50 = vector.broadcast %c1_i32 : i32 to vector<8x128xi32>
    %51 = arith.cmpi eq, %43, %50 : vector<8x128xi32>
    %52 = vector.shape_cast %34 : vector<1x128xf32> to vector<1x128xf32>
    %53 = vector.broadcast %52 : vector<1x128xf32> to vector<8x128xf32>
    %54 = arith.select %51, %53, %49 : vector<8x128xi1>, vector<8x128xf32>
    %c2_i32 = arith.constant 2 : i32
    %55 = vector.broadcast %c2_i32 : i32 to vector<8x128xi32>
    %56 = arith.cmpi eq, %43, %55 : vector<8x128xi32>
    %57 = vector.shape_cast %36 : vector<1x128xf32> to vector<1x128xf32>
    %58 = vector.broadcast %57 : vector<1x128xf32> to vector<8x128xf32>
    %59 = arith.select %56, %58, %54 : vector<8x128xi1>, vector<8x128xf32>
    %c3_i32 = arith.constant 3 : i32
    %60 = vector.broadcast %c3_i32 : i32 to vector<8x128xi32>
    %61 = arith.cmpi eq, %43, %60 : vector<8x128xi32>
    %62 = vector.shape_cast %38 : vector<1x128xf32> to vector<1x128xf32>
    %63 = vector.broadcast %62 : vector<1x128xf32> to vector<8x128xf32>
    %64 = arith.select %61, %63, %59 : vector<8x128xi1>, vector<8x128xf32>
    %c4_i32 = arith.constant 4 : i32
    %65 = vector.broadcast %c4_i32 : i32 to vector<8x128xi32>
    %66 = arith.cmpi eq, %43, %65 : vector<8x128xi32>
    %67 = vector.shape_cast %40 : vector<1x128xf32> to vector<1x128xf32>
    %68 = vector.broadcast %67 : vector<1x128xf32> to vector<8x128xf32>
    %69 = arith.select %66, %68, %64 : vector<8x128xi1>, vector<8x128xf32>
    %c5_i32 = arith.constant 5 : i32
    %70 = vector.broadcast %c5_i32 : i32 to vector<8x128xi32>
    %71 = arith.cmpi eq, %43, %70 : vector<8x128xi32>
    %72 = vector.shape_cast %42 : vector<1x128xf32> to vector<1x128xf32>
    %73 = vector.broadcast %72 : vector<1x128xf32> to vector<8x128xf32>
    %74 = arith.select %71, %73, %69 : vector<8x128xi1>, vector<8x128xf32>
    %c0_26 = arith.constant 0 : index
    %c0_27 = arith.constant 0 : index
    %c0_28 = arith.constant 0 : index
    %75 = vector.load %arg10[%c0_26, %c0_27, %c0_28] : memref<1x8x128xf32, #tpu.memory_space<vmem>>, vector<1x8x128xf32>
    %76 = vector.shape_cast %75 : vector<1x8x128xf32> to vector<8x128xf32>
    %77 = vector.shape_cast %74 : vector<8x128xf32> to vector<1x8x128xf32>
    tpu.vector_store %arg10[%c0_26, %c0_27, %c0_28], %77 {strides = array<i32>} : memref<1x8x128xf32, #tpu.memory_space<vmem>>, vector<1x8x128xf32>,
    return
  }
  func.func @transform_0(%arg0: i32) -> i32 {
    %c0_i32 = arith.constant 0 : i32
    %c0_i32_0 = arith.constant 0 : i32
    return %c0_i32 : i32
  }
  func.func @transform_1(%arg0: i32) -> (i32, i32) {
    %c0_i32 = arith.constant 0 : i32
    %c0_i32_0 = arith.constant 0 : i32
    return %arg0, %c0_i32 : i32, i32
  }
  func.func @transform_2(%arg0: i32) -> (i32, i32) {
    %c0_i32 = arith.constant 0 : i32
    %c0_i32_0 = arith.constant 0 : i32
    return %arg0, %c0_i32 : i32, i32
  }
  func.func @transform_3(%arg0: i32) -> (i32, i32) {
    %c0_i32 = arith.constant 0 : i32
    %c0_i32_0 = arith.constant 0 : i32
    return %arg0, %c0_i32 : i32, i32
  }
  func.func @transform_4(%arg0: i32) -> (i32, i32) {
    %c0_i32 = arith.constant 0 : i32
    %c0_i32_0 = arith.constant 0 : i32
    return %arg0, %c0_i32 : i32, i32
  }
  func.func @transform_5(%arg0: i32) -> (i32, i32) {
    %c0_i32 = arith.constant 0 : i32
    %c0_i32_0 = arith.constant 0 : i32
    return %arg0, %c0_i32 : i32, i32
  }
  func.func @transform_6(%arg0: i32) -> (i32, i32) {
    %c0_i32 = arith.constant 0 : i32
    %c0_i32_0 = arith.constant 0 : i32
    return %arg0, %c0_i32 : i32, i32
  }
  func.func @transform_7(%arg0: i32) -> (i32, i32) {
    %c0_i32 = arith.constant 0 : i32
    %c0_i32_0 = arith.constant 0 : i32
    return %arg0, %c0_i32 : i32, i32
  }
  func.func @transform_8(%arg0: i32) -> (i32, i32) {
    %c0_i32 = arith.constant 0 : i32
    %c0_i32_0 = arith.constant 0 : i32
    return %arg0, %c0_i32 : i32, i32
  }
  func.func @transform_9(%arg0: i32) -> (i32, i32, i32) {
    %c0_i32 = arith.constant 0 : i32
    %c0_i32_0 = arith.constant 0 : i32
    %c0_i32_1 = arith.constant 0 : i32
    return %arg0, %c0_i32, %c0_i32_0 : i32, i32, i32
  }
}

module attributes {stable_mosaic.version = 11 : i64} {
  func.func @kernel(%arg0: i32, %arg1: memref<2xf32, #tpu.memory_space<smem>>, %arg2: memref<64x128xf32, #tpu.memory_space<vmem>>, %arg3: memref<64x128xf32, #tpu.memory_space<vmem>>, %arg4: memref<64x128xf32, #tpu.memory_space<vmem>>, %arg5: memref<1x8x128xf32, #tpu.memory_space<vmem>>) attributes {dimension_semantics = [#tpu.dimension_semantics<parallel>], iteration_bounds = array<i64: 2>, scalar_prefetch = 0 : i64, scratch_operands = 0 : i64, tpu.core_type = #tpu.core_type<tc>, window_params = [{transform_indices = @transform_0, window_bounds = array<i64: 2>}, {transform_indices = @transform_1, window_bounds = array<i64: 64, 128>}, {transform_indices = @transform_2, window_bounds = array<i64: 64, 128>}, {transform_indices = @transform_3, window_bounds = array<i64: 64, 128>}, {transform_indices = @transform_4, window_bounds = array<i64: 1, 8, 128>}]} {
    %c0 = arith.constant 0 : index
    %c0_0 = arith.constant 0 : index
    %0 = vector.load %arg2[%c0, %c0_0] : memref<64x128xf32, #tpu.memory_space<vmem>>, vector<64x128xf32>
    %c0_1 = arith.constant 0 : index
    %1 = memref.load %arg1[%c0_1] : memref<2xf32, #tpu.memory_space<smem>>
    %2 = vector.broadcast %1 : f32 to vector<64x128xf32>
    %3 = arith.subf %0, %2 : vector<64x128xf32>
    %c1 = arith.constant 1 : index
    %4 = memref.load %arg1[%c1] : memref<2xf32, #tpu.memory_space<smem>>
    %5 = vector.broadcast %4 : f32 to vector<64x128xf32>
    %6 = arith.mulf %3, %5 : vector<64x128xf32>
    %c0_2 = arith.constant 0 : index
    %c0_3 = arith.constant 0 : index
    %7 = vector.load %arg4[%c0_2, %c0_3] : memref<64x128xf32, #tpu.memory_space<vmem>>, vector<64x128xf32>
    %c0_4 = arith.constant 0 : index
    %c0_5 = arith.constant 0 : index
    %8 = vector.load %arg3[%c0_4, %c0_5] : memref<64x128xf32, #tpu.memory_space<vmem>>, vector<64x128xf32>
    %9 = arith.subf %7, %8 : vector<64x128xf32>
    %10 = math.exp %9 : vector<64x128xf32>
    %cst = arith.constant 0.000000e+00 : f32
    %11 = vector.broadcast %cst : f32 to vector<64x128xf32>
    %12 = arith.subf %11, %6 : vector<64x128xf32>
    %13 = arith.mulf %12, %10 : vector<64x128xf32>
    %cst_6 = arith.constant 0.000000e+00 : f32
    %14 = vector.broadcast %cst_6 : f32 to vector<64x128xf32>
    %15 = arith.subf %14, %6 : vector<64x128xf32>
    %cst_7 = arith.constant 8.000000e-01 : f32
    %cst_8 = arith.constant 1.200000e+00 : f32
    %16 = vector.broadcast %cst_7 : f32 to vector<64x128xf32>
    %17 = arith.maximumf %16, %10 : vector<64x128xf32>
    %18 = vector.broadcast %cst_8 : f32 to vector<64x128xf32>
    %19 = arith.minimumf %18, %17 : vector<64x128xf32>
    %20 = arith.mulf %15, %19 : vector<64x128xf32>
    %21 = arith.maximumf %13, %20 : vector<64x128xf32>
    %cst_9 = arith.constant dense<0.000000e+00> : vector<128xf32>
    %22 = vector.multi_reduction <add>, %21, %cst_9 [0] : vector<64x128xf32> to vector<128xf32>
    %23 = vector.shape_cast %22 : vector<128xf32> to vector<1x128xf32>
    %24 = tpu.iota {dimensions = array<i32: 0>} : vector<8x128xi32>
    %cst_10 = arith.constant 0.000000e+00 : f32
    %25 = vector.broadcast %cst_10 : f32 to vector<8x128xf32>
    %c0_i32 = arith.constant 0 : i32
    %26 = vector.broadcast %c0_i32 : i32 to vector<8x128xi32>
    %27 = arith.cmpi eq, %24, %26 : vector<8x128xi32>
    %28 = vector.shape_cast %23 : vector<1x128xf32> to vector<1x128xf32>
    %29 = vector.broadcast %28 : vector<1x128xf32> to vector<8x128xf32>
    %30 = arith.select %27, %29, %25 : vector<8x128xi1>, vector<8x128xf32>
    %c0_11 = arith.constant 0 : index
    %c0_12 = arith.constant 0 : index
    %c0_13 = arith.constant 0 : index
    %31 = vector.load %arg5[%c0_11, %c0_12, %c0_13] : memref<1x8x128xf32, #tpu.memory_space<vmem>>, vector<1x8x128xf32>
    %32 = vector.shape_cast %31 : vector<1x8x128xf32> to vector<8x128xf32>
    %33 = vector.shape_cast %30 : vector<8x128xf32> to vector<1x8x128xf32>
    tpu.vector_store %arg5[%c0_11, %c0_12, %c0_13], %33 {strides = array<i32>} : memref<1x8x128xf32, #tpu.memory_space<vmem>>, vector<1x8x128xf32>,
    return
  }
  func.func @transform_0(%arg0: i32) -> i32 {
    %c0_i32 = arith.constant 0 : i32
    %c0_i32_0 = arith.constant 0 : i32
    return %c0_i32 : i32
  }
  func.func @transform_1(%arg0: i32) -> (i32, i32) {
    %c0_i32 = arith.constant 0 : i32
    %c0_i32_0 = arith.constant 0 : i32
    return %arg0, %c0_i32 : i32, i32
  }
  func.func @transform_2(%arg0: i32) -> (i32, i32) {
    %c0_i32 = arith.constant 0 : i32
    %c0_i32_0 = arith.constant 0 : i32
    return %arg0, %c0_i32 : i32, i32
  }
  func.func @transform_3(%arg0: i32) -> (i32, i32) {
    %c0_i32 = arith.constant 0 : i32
    %c0_i32_0 = arith.constant 0 : i32
    return %arg0, %c0_i32 : i32, i32
  }
  func.func @transform_4(%arg0: i32) -> (i32, i32, i32) {
    %c0_i32 = arith.constant 0 : i32
    %c0_i32_0 = arith.constant 0 : i32
    %c0_i32_1 = arith.constant 0 : i32
    return %arg0, %c0_i32, %c0_i32_0 : i32, i32, i32
  }
}

</mosaic_0001>

<llo_original>
// kernel: ppo_loss.3
$region0: #{ppo_loss.3}
  #allocation0 [shape = 'u32[]', space=smem, size = 0x4, offset = 0x4, fixed_abs, tag = 'smem constant byte address 0x4 - core index']
  #allocation1 [shape = 'u32[144,128]{1,0:T(1,128)}', space=vmem, size = 0x12000, scoped, tag = 'internal scratch']
  %s0 = inlined_call_operand.vmem [shape: f32[2], index: 0, kind: input, shape index: {}]
  %s1 = inlined_call_operand.vmem [shape: f32[128,128], index: 1, kind: input, shape index: {}]
  %s2 = inlined_call_operand.vmem [shape: f32[128,128], index: 2, kind: input, shape index: {}]
  %s3 = inlined_call_operand.vmem [shape: f32[128,128], index: 3, kind: input, shape index: {}]
  %s4 = inlined_call_operand.vmem [shape: f32[2,8,128], index: 4, kind: output, shape index: {}]
  %s5 = sld [smem:[#allocation0]]
  $region53: #{ppo_loss.3} parent=0
    _
  %s7 = ssub.s32 1, %s5
  %s8 = scalar_select 0, %s7, %s5
  $region1: #{ppo_loss.3} parent=0
    #allocation2 [shape = 'u8[512]{0}', space=smem, size = 0x200, scoped, tag = 'input window, operand 0, single buffered']
    #allocation3 [shape = 's32[2]{0}', space=sflag, size = 0x8, scoped, tag = 'scoped memory for ppo_loss.3']
    %9 = vsyncpa [#allocation3], 0
    loop: start=0, step=1, limit=4
    $region2: #{ppo_loss.3} parent=1 // loop_pre_header
      _
    $region3: #{ppo_loss.3} parent=1 // loop_header
      %s11 = sphi 0, %s15
      %p12 = scmp.ge.s32.totalorder %s11, 4
      %s19 = sphi 0, %s19
      %s21 = sphi 0, %s19
      %s22 = sphi 0, %s21
      %s36 = sphi 0, %s22
      %s42 = sphi 0, %s44
      %s45 = sphi 0, %s42
      %s46 = sphi 0, %s45
      %s62 = sphi 0, %s46
      %s68 = sphi 0, %s70
      %s71 = sphi 0, %s68
      %s72 = sphi 0, %s71
      %s88 = sphi 0, %s72
      %s94 = sphi 0, %s96
      %s97 = sphi 0, %s94
      %s98 = sphi 0, %s97
      %s114 = sphi 0, %s98
      %s120 = sphi 0, %s122
      %s123 = sphi 0, %s120
      %s124 = sphi 0, %s123
      %s140 = sphi 0, %s124
    $region4: #{ppo_loss.3} parent=1 // loop_header_branch
      %14 = sbr.rel (%p12) target = $region8
    $region5: #{ppo_loss.3} parent=1 // loop_body
      %s16 = ssub.s32 %s11, 1
      %s17 = ssub.s32 %s11, 2
      %s18 = sadd.s32 %s11, 1
      %s20 = sadd.s32 %s19, 1
      %p23 = scmp.eq.s32.totalorder %s11, 1
      %p24 = scmp.ne.s32.totalorder %s19, %s21
      %p25 = scmp.eq.s32.totalorder %s11, 0
      %p26 = por %p24, %p25
      %p27 = scmp.ne.s32.totalorder %s19, %s21
      %p28 = scmp.eq.s32.totalorder %s16, 1
      %p29 = por %p27, %p28
      %p30 = scmp.ne.s32.totalorder %s21, %s22
      %p31 = scmp.eq.s32.totalorder %s16, 0
      %p32 = por %p30, %p31
      %p33 = scmp.ne.s32.totalorder %s21, %s22
      %p34 = scmp.eq.s32.totalorder %s17, 1
      %p35 = por %p33, %p34
      %p37 = scmp.ne.s32.totalorder %s22, %s36
      %p38 = scmp.eq.s32.totalorder %s17, 0
      %p39 = por %p37, %p38
      %s40 = ssub.s32 %s11, %s18
      %p41 = scmp.eq.s32.totalorder %s40, 0
      %s43 = sadd.s32 %s42, 1
      %s44 = scalar_select %p41, %s42, %s43
      %p47 = pneg %p41
      %p48 = scmp.eq.s32.totalorder %s11, 1
      %p49 = por %p47, %p48
      %p50 = scmp.ne.s32.totalorder %s42, %s45
      %p51 = scmp.eq.s32.totalorder %s11, 0
      %p52 = por %p50, %p51
      %p53 = scmp.ne.s32.totalorder %s42, %s45
      %p54 = scmp.eq.s32.totalorder %s16, 1
      %p55 = por %p53, %p54
      %p56 = scmp.ne.s32.totalorder %s45, %s46
      %p57 = scmp.eq.s32.totalorder %s16, 0
      %p58 = por %p56, %p57
      %p59 = scmp.ne.s32.totalorder %s45, %s46
      %p60 = scmp.eq.s32.totalorder %s17, 1
      %p61 = por %p59, %p60
      %p63 = scmp.ne.s32.totalorder %s46, %s62
      %p64 = scmp.eq.s32.totalorder %s17, 0
      %p65 = por %p63, %p64
      %s66 = ssub.s32 %s11, %s18
      %p67 = scmp.eq.s32.totalorder %s66, 0
      %s69 = sadd.s32 %s68, 1
      %s70 = scalar_select %p67, %s68, %s69
      %p73 = pneg %p67
      %p74 = scmp.eq.s32.totalorder %s11, 1
      %p75 = por %p73, %p74
      %p76 = scmp.ne.s32.totalorder %s68, %s71
      %p77 = scmp.eq.s32.totalorder %s11, 0
      %p78 = por %p76, %p77
      %p79 = scmp.ne.s32.totalorder %s68, %s71
      %p80 = scmp.eq.s32.totalorder %s16, 1
      %p81 = por %p79, %p80
      %p82 = scmp.ne.s32.totalorder %s71, %s72
      %p83 = scmp.eq.s32.totalorder %s16, 0
      %p84 = por %p82, %p83
      %p85 = scmp.ne.s32.totalorder %s71, %s72
      %p86 = scmp.eq.s32.totalorder %s17, 1
      %p87 = por %p85, %p86
      %p89 = scmp.ne.s32.totalorder %s72, %s88
      %p90 = scmp.eq.s32.totalorder %s17, 0
      %p91 = por %p89, %p90
      %s92 = ssub.s32 %s11, %s18
      %p93 = scmp.eq.s32.totalorder %s92, 0
      %s95 = sadd.s32 %s94, 1
      %s96 = scalar_select %p93, %s94, %s95
      %p99 = pneg %p93
      %p100 = scmp.eq.s32.totalorder %s11, 1
      %p101 = por %p99, %p100
      %p102 = scmp.ne.s32.totalorder %s94, %s97
      %p103 = scmp.eq.s32.totalorder %s11, 0
      %p104 = por %p102, %p103
      %p105 = scmp.ne.s32.totalorder %s94, %s97
      %p106 = scmp.eq.s32.totalorder %s16, 1
      %p107 = por %p105, %p106
      %p108 = scmp.ne.s32.totalorder %s97, %s98
      %p109 = scmp.eq.s32.totalorder %s16, 0
      %p110 = por %p108, %p109
      %p111 = scmp.ne.s32.totalorder %s97, %s98
      %p112 = scmp.eq.s32.totalorder %s17, 1
      %p113 = por %p111, %p112
      %p115 = scmp.ne.s32.totalorder %s98, %s114
      %p116 = scmp.eq.s32.totalorder %s17, 0
      %p117 = por %p115, %p116
      %s118 = ssub.s32 %s11, %s18
      %p119 = scmp.eq.s32.totalorder %s118, 0
      %s121 = sadd.s32 %s120, 1
      %s122 = scalar_select %p119, %s120, %s121
      %p125 = pneg %p119
      %p126 = scmp.eq.s32.totalorder %s11, 1
      %p127 = por %p125, %p126
      %p128 = scmp.ne.s32.totalorder %s120, %s123
      %p129 = scmp.eq.s32.totalorder %s11, 0
      %p130 = por %p128, %p129
      %p131 = scmp.ne.s32.totalorder %s120, %s123
      %p132 = scmp.eq.s32.totalorder %s16, 1
      %p133 = por %p131, %p132
      %p134 = scmp.ne.s32.totalorder %s123, %s124
      %p135 = scmp.eq.s32.totalorder %s16, 0
      %p136 = por %p134, %p135
      %p137 = scmp.ne.s32.totalorder %s123, %s124
      %p138 = scmp.eq.s32.totalorder %s17, 1
      %p139 = por %p137, %p138
      %p141 = scmp.ne.s32.totalorder %s124, %s140
      %p142 = scmp.eq.s32.totalorder %s17, 0
      %p143 = por %p141, %p142
      %p144 = scmp.le.s32.totalorder 1, %s11
      %p145 = scmp.lt.s32.totalorder %s11, 3
      %p146 = pnand %p144, %p145
      %p147 = pneg %p146
      // Predicated region
      $region9: #{ppo_loss.3} parent=5 // pred_check
        _
      $region10: #{ppo_loss.3} parent=5 // pred_check_branch
        %149 = sbr.rel (%p146) target = $region12
      $region11: #{ppo_loss.3} parent=5 // pred_region
        %s150 = ssub.s32 %s11, 1
        // Predicated region
        $region13: #{ppo_loss.3} parent=11 // pred_check
          %p151 = pneg %p32
        $region14: #{ppo_loss.3} parent=11 // pred_check_branch
          %153 = sbr.rel (%p151) target = $region16
        $region15: #{ppo_loss.3} parent=11 // pred_region
          %s155 = ssub.s32 16, 16
          %156 = vsyncadd [#allocation3], %s155
          %s158 = sshll.u32 %s0, 4
          %s159 = int_to_ptr.vmem [resolvable:$true] %s158
          %161 = dma.vmem_to_smem %s159, 16, [#allocation2], [#allocation3]
        $region16: #{ppo_loss.3} parent=11 // pred_fallthru
          _
      $region12: #{ppo_loss.3} parent=5 // pred_fallthru
        _
      %p162 = scmp.lt.s32.totalorder %s11, 2
      // Predicated region
      $region17: #{ppo_loss.3} parent=5 // pred_check
        %p163 = pneg %p162
      $region18: #{ppo_loss.3} parent=5 // pred_check_branch
        %165 = sbr.rel (%p163) target = $region20
      $region19: #{ppo_loss.3} parent=5 // pred_region
        // Predicated region
        $region21: #{ppo_loss.3} parent=19 // pred_check
          %p166 = pneg %p52
        $region22: #{ppo_loss.3} parent=19 // pred_check_branch
          %168 = sbr.rel (%p166) target = $region24
        $region23: #{ppo_loss.3} parent=19 // pred_region
          %s169 = smul.u32 8, %s11
          %p170 = scmp.lt.s32.totalorder %s169, 15
          %s171 = scalar_select %p170, %s169, 15
          %s172 = smul.addr %s171, 8
          %s173 = scalar_lea.vmem %s1, %s172
          %s174 = smul.u32 8, %s11
        $region24: #{ppo_loss.3} parent=19 // pred_fallthru
          _
        // Predicated region
        $region25: #{ppo_loss.3} parent=19 // pred_check
          %p175 = pneg %p78
        $region26: #{ppo_loss.3} parent=19 // pred_check_branch
          %177 = sbr.rel (%p175) target = $region28
        $region27: #{ppo_loss.3} parent=19 // pred_region
          %s178 = smul.u32 8, %s11
          %p179 = scmp.lt.s32.totalorder %s178, 15
          %s180 = scalar_select %p179, %s178, 15
          %s181 = smul.addr %s180, 8
          %s182 = scalar_lea.vmem %s2, %s181
          %s183 = smul.u32 8, %s11
        $region28: #{ppo_loss.3} parent=19 // pred_fallthru
          _
        // Predicated region
        $region29: #{ppo_loss.3} parent=19 // pred_check
          %p184 = pneg %p104
        $region30: #{ppo_loss.3} parent=19 // pred_check_branch
          %186 = sbr.rel (%p184) target = $region32
        $region31: #{ppo_loss.3} parent=19 // pred_region
          %s187 = smul.u32 8, %s11
          %p188 = scmp.lt.s32.totalorder %s187, 15
          %s189 = scalar_select %p188, %s187, 15
          %s190 = smul.addr %s189, 8
          %s191 = scalar_lea.vmem %s3, %s190
          %s192 = smul.u32 8, %s11
        $region32: #{ppo_loss.3} parent=19 // pred_fallthru
          _
      $region20: #{ppo_loss.3} parent=5 // pred_fallthru
        _
      %p193 = scmp.le.s32.totalorder 1, %s11
      %p194 = scmp.lt.s32.totalorder %s11, 3
      %p195 = pnand %p193, %p194
      %p196 = pneg %p195
      // Predicated region
      $region33: #{ppo_loss.3} parent=5 // pred_check
        _
      $region34: #{ppo_loss.3} parent=5 // pred_check_branch
        %198 = sbr.rel (%p195) target = $region36
      $region35: #{ppo_loss.3} parent=5 // pred_region
        %s199 = ssub.s32 %s11, 1
        // Predicated region
        $region37: #{ppo_loss.3} parent=35 // pred_check
          %p200 = pneg %p32
        $region38: #{ppo_loss.3} parent=35 // pred_check_branch
          %202 = sbr.rel (%p200) target = $region40
        $region39: #{ppo_loss.3} parent=35 // pred_region
          %203 = dma.done [#allocation3], 16
        $region40: #{ppo_loss.3} parent=35 // pred_fallthru
          _
        %204 = sfence
        %p205 = pneg %p32
        %p206 = pneg %p29
        %s207 = smul.u32 8, %s16
        %p208 = scmp.lt.s32.totalorder %s207, 15
        %s209 = scalar_select %p208, %s207, 15
        %s210 = smul.addr %s209, 8
        %s211 = scalar_lea.vmem %s1, %s210
        %p212 = pneg %p58
        %p213 = pneg %p55
        %s214 = smul.u32 8, %s16
        %p215 = scmp.lt.s32.totalorder %s214, 15
        %s216 = scalar_select %p215, %s214, 15
        %s217 = smul.addr %s216, 8
        %s218 = scalar_lea.vmem %s2, %s217
        %p219 = pneg %p84
        %p220 = pneg %p81
        %s221 = smul.u32 8, %s16
        %p222 = scmp.lt.s32.totalorder %s221, 15
        %s223 = scalar_select %p222, %s221, 15
        %s224 = smul.addr %s223, 8
        %s225 = scalar_lea.vmem %s3, %s224
        %p226 = pneg %p110
        %p227 = pneg %p107
        %p228 = pneg %p136
        %p229 = pneg %p133
        %p230 = scmp.lt.s32.totalorder %s16, 1
        %s231 = scalar_select %p230, %s16, 1
        %s232 = smul.addr %s231, 8
        %s233 = scalar_lea.vmem %s4, %s232
        %s234 = smul.u32 8, %s16
        %p235 = scmp.lt.s32.totalorder %s234, 15
        %s236 = scalar_select %p235, %s234, 15
        %s237 = smul.addr %s236, 8
        %s238 = scalar_lea.vmem %s1, %s237
        %s239 = smul.u32 8, %s16
        %s240 = smul.u32 8, %s16
        %p241 = scmp.lt.s32.totalorder %s240, 15
        %s242 = scalar_select %p241, %s240, 15
        %s243 = smul.addr %s242, 8
        %s244 = scalar_lea.vmem %s2, %s243
        %s245 = smul.u32 8, %s16
        %s246 = smul.u32 8, %s16
        %p247 = scmp.lt.s32.totalorder %s246, 15
        %s248 = scalar_select %p247, %s246, 15
        %s249 = smul.addr %s248, 8
        %s250 = scalar_lea.vmem %s3, %s249
        %s251 = smul.u32 8, %s16
        %p252 = scmp.lt.s32.totalorder %s16, 1
        %s253 = scalar_select %p252, %s16, 1
        %s254 = smul.addr %s253, 8
        %s255 = scalar_lea.vmem %s4, %s254
        %v256 = vld [vmem:[%s238] sm:$0xff]
        %v257 = vld [vmem:[%s238 + $0x8] sm:$0xff]
        %v258 = vld [vmem:[%s238 + $0x10] sm:$0xff]
        %v259 = vld [vmem:[%s238 + $0x18] sm:$0xff]
        %v260 = vld [vmem:[%s238 + $0x20] sm:$0xff]
        %v261 = vld [vmem:[%s238 + $0x28] sm:$0xff]
        %v262 = vld [vmem:[%s238 + $0x30] sm:$0xff]
        %v263 = vld [vmem:[%s238 + $0x38] sm:$0xff]
        %s264 = sld [smem:[#allocation2]]
        %v265 = vstv %s264
        %v266 = vsub.f32 %v256, %v265
        %v267 = vsub.f32 %v257, %v265
        %v268 = vsub.f32 %v258, %v265
        %v269 = vsub.f32 %v259, %v265
        %v270 = vsub.f32 %v260, %v265
        %v271 = vsub.f32 %v261, %v265
        %v272 = vsub.f32 %v262, %v265
        %v273 = vsub.f32 %v263, %v265
        %s274 = sld [smem:[#allocation2 + $0x1]]
        %v275 = vstv %s274
        %v276 = vmul.f32 %v266, %v275
        %v277 = vmul.f32 %v267, %v275
        %v278 = vmul.f32 %v268, %v275
        %v279 = vmul.f32 %v269, %v275
        %v280 = vmul.f32 %v270, %v275
        %v281 = vmul.f32 %v271, %v275
        %v282 = vmul.f32 %v272, %v275
        %v283 = vmul.f32 %v273, %v275
        %v284 = vld [vmem:[%s250] sm:$0xff]
        %v285 = vld [vmem:[%s250 + $0x8] sm:$0xff]
        %v286 = vld [vmem:[%s250 + $0x10] sm:$0xff]
        %v287 = vld [vmem:[%s250 + $0x18] sm:$0xff]
        %v288 = vld [vmem:[%s250 + $0x20] sm:$0xff]
        %v289 = vld [vmem:[%s250 + $0x28] sm:$0xff]
        %v290 = vld [vmem:[%s250 + $0x30] sm:$0xff]
        %v291 = vld [vmem:[%s250 + $0x38] sm:$0xff]
        %v292 = vld [vmem:[%s244] sm:$0xff]
        %v293 = vld [vmem:[%s244 + $0x8] sm:$0xff]
        %v294 = vld [vmem:[%s244 + $0x10] sm:$0xff]
        %v295 = vld [vmem:[%s244 + $0x18] sm:$0xff]
        %v296 = vld [vmem:[%s244 + $0x20] sm:$0xff]
        %v297 = vld [vmem:[%s244 + $0x28] sm:$0xff]
        %v298 = vld [vmem:[%s244 + $0x30] sm:$0xff]
        %v299 = vld [vmem:[%s244 + $0x38] sm:$0xff]
        %v300 = vsub.f32 %v284, %v292
        %v301 = vsub.f32 %v285, %v293
        %v302 = vsub.f32 %v286, %v294
        %v303 = vsub.f32 %v287, %v295
        %v304 = vsub.f32 %v288, %v296
        %v305 = vsub.f32 %v289, %v297
        %v306 = vsub.f32 %v290, %v298
        %v307 = vsub.f32 %v291, %v299
        %v308 = vmul.f32 %v300, 1.442695
        %v309 = vpow.pop %v308
        %v310 = vmul.f32 %v301, 1.442695
        %v311 = vpow.pop %v310
        %v312 = vmul.f32 %v302, 1.442695
        %v313 = vpow.pop %v312
        %v314 = vmul.f32 %v303, 1.442695
        %v315 = vpow.pop %v314
        %v316 = vmul.f32 %v304, 1.442695
        %v317 = vpow.pop %v316
        %v318 = vmul.f32 %v305, 1.442695
        %v319 = vpow.pop %v318
        %v320 = vmul.f32 %v306, 1.442695
        %v321 = vpow.pop %v320
        %v322 = vmul.f32 %v307, 1.442695
        %v323 = vpow.pop %v322
        %v324 = vsub.f32 0.0, %v276
        %v325 = vsub.f32 0.0, %v277
        %v326 = vsub.f32 0.0, %v278
        %v327 = vsub.f32 0.0, %v279
        %v328 = vsub.f32 0.0, %v280
        %v329 = vsub.f32 0.0, %v281
        %v330 = vsub.f32 0.0, %v282
        %v331 = vsub.f32 0.0, %v283
        %v332 = vmul.f32 %v324, %v309
        %v333 = vmul.f32 %v325, %v311
        %v334 = vmul.f32 %v326, %v313
        %v335 = vmul.f32 %v327, %v315
        %v336 = vmul.f32 %v328, %v317
        %v337 = vmul.f32 %v329, %v319
        %v338 = vmul.f32 %v330, %v321
        %v339 = vmul.f32 %v331, %v323
        %v340 = vmax.f32 %v309, 0.8
        %v341 = vmax.f32 %v311, 0.8
        %v342 = vmax.f32 %v313, 0.8
        %v343 = vmax.f32 %v315, 0.8
        %v344 = vmax.f32 %v317, 0.8
        %v345 = vmax.f32 %v319, 0.8
        %v346 = vmax.f32 %v321, 0.8
        %v347 = vmax.f32 %v323, 0.8
        %v348 = vmin.f32 %v340, 1.2
        %v349 = vmin.f32 %v341, 1.2
        %v350 = vmin.f32 %v342, 1.2
        %v351 = vmin.f32 %v343, 1.2
        %v352 = vmin.f32 %v344, 1.2
        %v353 = vmin.f32 %v345, 1.2
        %v354 = vmin.f32 %v346, 1.2
        %v355 = vmin.f32 %v347, 1.2
        %v356 = vmul.f32 %v324, %v348
        %v357 = vmul.f32 %v325, %v349
        %v358 = vmul.f32 %v326, %v350
        %v359 = vmul.f32 %v327, %v351
        %v360 = vmul.f32 %v328, %v352
        %v361 = vmul.f32 %v329, %v353
        %v362 = vmul.f32 %v330, %v354
        %v363 = vmul.f32 %v331, %v355
        %v364 = vmax.f32 %v332, %v356
        %v365 = vmax.f32 %v333, %v357
        %v366 = vmax.f32 %v334, %v358
        %v367 = vmax.f32 %v335, %v359
        %v368 = vmax.f32 %v336, %v360
        %v369 = vmax.f32 %v337, %v361
        %v370 = vmax.f32 %v338, %v362
        %v371 = vmax.f32 %v339, %v363
        %v372 = vadd.f32 %v364, %v365
        %v373 = vadd.f32 %v372, %v366
        %v374 = vadd.f32 %v373, %v367
        %v375 = vadd.f32 %v374, %v368
        %v376 = vadd.f32 %v375, %v369
        %v377 = vadd.f32 %v376, %v370
        %v378 = vadd.f32 %v377, %v371
        %v379 = vrot.slane %v378, 4
        %v380 = vadd.f32 %v378, %v379
        %v381 = vrot.slane %v380, 2
        %v382 = vadd.f32 %v380, %v381
        %v383 = vrot.slane %v382, 1
        %v384 = vadd.f32 %v382, %v383
        %v385 = vlaneseq
        %v386 = vshrl.u32 %v385, 7
        %vm387 = vcmp.eq.s32.totalorder %v386, 0
        %v388 = vsel %vm387, %v384, 0.0
        %389 = vst [vmem:[%s255] sm:$0xff] %v388
        %p390 = scmp.lt.s32.totalorder %s16, 1
        %s391 = scalar_select %p390, %s16, 1
        %s392 = smul.addr %s391, 8
        %s393 = scalar_lea.vmem %s4, %s392
        // Predicated region
        $region41: #{ppo_loss.3} parent=35 // pred_check
          %p394 = pneg %p133
        $region42: #{ppo_loss.3} parent=35 // pred_check_branch
          %396 = sbr.rel (%p394) target = $region44
        $region43: #{ppo_loss.3} parent=35 // pred_region
          _
        $region44: #{ppo_loss.3} parent=35 // pred_fallthru
          _
      $region36: #{ppo_loss.3} parent=5 // pred_fallthru
        _
      %p397 = scmp.le.s32.totalorder 2, %s11
      // Predicated region
      $region45: #{ppo_loss.3} parent=5 // pred_check
        %p398 = pneg %p397
      $region46: #{ppo_loss.3} parent=5 // pred_check_branch
        %400 = sbr.rel (%p398) target = $region48
      $region47: #{ppo_loss.3} parent=5 // pred_region
        %s401 = ssub.s32 %s11, 2
        // Predicated region
        $region49: #{ppo_loss.3} parent=47 // pred_check
          %p402 = pneg %p139
        $region50: #{ppo_loss.3} parent=47 // pred_check_branch
          %404 = sbr.rel (%p402) target = $region52
        $region51: #{ppo_loss.3} parent=47 // pred_region
          %p405 = scmp.lt.s32.totalorder %s17, 1
          %s406 = scalar_select %p405, %s17, 1
          %s407 = smul.addr %s406, 8
          %s408 = scalar_lea.vmem %s4, %s407
        $region52: #{ppo_loss.3} parent=47 // pred_fallthru
          _
      $region48: #{ppo_loss.3} parent=5 // pred_fallthru
        _
    $region6: #{ppo_loss.3} parent=1 // loop_footer
      %s15 = sadd.s32 1, %s11
    $region7: #{ppo_loss.3} parent=1 // loop_footer_branch
      %10 = sbr.rel target = $region3
    $region8: #{ppo_loss.3} parent=1 // loop_exit
      _
    %409 = vsyncpa [#allocation3], 1
    %s410 = scalar_lea.sflag [#allocation3], 1
    %411 = vsyncpa %s410, 1

// kernel: ppo_loss.2
$region0: #{ppo_loss.2}
  #allocation0 [shape = 'u32[]', space=smem, size = 0x4, offset = 0x4, fixed_abs, tag = 'smem constant byte address 0x4 - core index']
  #allocation1 [shape = 'u32[144,128]{1,0:T(1,128)}', space=vmem, size = 0x12000, scoped, tag = 'internal scratch']
  #allocation2 [shape = 'f32[1]{0:T(128)S(6)}', space=smem, size = 0x200, scoped, tag = 'scoped memory for ppo_loss.2']
  %s0 = inlined_call_operand.<no memory space> [shape: f32[1], index: 0, kind: input, shape index: {}]
  %s1 = inlined_call_operand.hbm [shape: f32[128,128], index: 1, kind: input, shape index: {}]
  %s2 = inlined_call_operand.hbm [shape: f32[128,128], index: 2, kind: input, shape index: {}]
  %s3 = inlined_call_operand.hbm [shape: f32[128,128], index: 3, kind: input, shape index: {}]
  %s4 = inlined_call_operand.hbm [shape: f32[128,128], index: 4, kind: input, shape index: {}]
  %s5 = inlined_call_operand.hbm [shape: f32[128,128], index: 5, kind: input, shape index: {}]
  %s6 = inlined_call_operand.hbm [shape: f32[128,128], index: 6, kind: input, shape index: {}]
  %s7 = inlined_call_operand.hbm [shape: f32[128,128], index: 7, kind: input, shape index: {}]
  %s8 = inlined_call_operand.vmem [shape: s8[128,128], index: 8, kind: output, shape index: {0}]
  %s9 = inlined_call_operand.vmem [shape: f32[4,8,128], index: 9, kind: output, shape index: {1}]
  %10 = xla_tuple %s8, %s9
  %s11 = sld [smem:[#allocation0]]
  $region101: #{ppo_loss.2} parent=0
    _
  %s13 = ssub.s32 1, %s11
  %s14 = scalar_select 0, %s13, %s11
  %15 = sst [smem:[#allocation2]] %s0
  $region1: #{ppo_loss.2} parent=0
    #allocation3 [shape = 'u8[32768]{0}', space=vmem, size = 0x8000, scoped, tag = 'input window, operand 1']
    #allocation4 [shape = 's32[2]{0}', space=sflag, size = 0x8, scoped, tag = 'scoped memory for ppo_loss.2']
    #allocation5 [shape = 'u8[32768]{0}', space=vmem, size = 0x8000, scoped, tag = 'input window, operand 2']
    #allocation6 [shape = 's32[2]{0}', space=sflag, size = 0x8, scoped, tag = 'scoped memory for ppo_loss.2']
    #allocation7 [shape = 'u8[32768]{0}', space=vmem, size = 0x8000, scoped, tag = 'input window, operand 3']
    #allocation8 [shape = 'u8[32768]{0}', space=vmem, size = 0x8000, scoped, tag = 'input window, operand 4']
    #allocation9 [shape = 's32[2]{0}', space=sflag, size = 0x8, scoped, tag = 'scoped memory for ppo_loss.2']
    #allocation10 [shape = 'u8[32768]{0}', space=vmem, size = 0x8000, scoped, tag = 'input window, operand 5']
    #allocation11 [shape = 'u8[32768]{0}', space=vmem, size = 0x8000, scoped, tag = 'input window, operand 6']
    #allocation12 [shape = 's32[2]{0}', space=sflag, size = 0x8, scoped, tag = 'scoped memory for ppo_loss.2']
    #allocation13 [shape = 'u8[32768]{0}', space=vmem, size = 0x8000, scoped, tag = 'input window, operand 7']
    %16 = vsyncpa [#allocation4], 0
    %s17 = scalar_lea.sflag [#allocation4], 1
    %18 = vsyncpa %s17, 0
    %19 = vsyncpa [#allocation6], 0
    %s20 = scalar_lea.sflag [#allocation6], 1
    %21 = vsyncpa %s20, 0
    %22 = vsyncpa [#allocation9], 0
    %s23 = scalar_lea.sflag [#allocation9], 1
    %24 = vsyncpa %s23, 0
    %25 = vsyncpa [#allocation12], 0
    %s26 = scalar_lea.sflag [#allocation12], 1
    %27 = vsyncpa %s26, 0
    loop: start=0, step=1, limit=6
    $region2: #{ppo_loss.2} parent=1 // loop_pre_header
      _
    $region3: #{ppo_loss.2} parent=1 // loop_header
      %s29 = sphi 0, %s33
      %p30 = scmp.ge.s32.totalorder %s29, 6
      %s37 = sphi 0, %s37
      %s39 = sphi 0, %s37
      %s40 = sphi 0, %s39
      %s54 = sphi 0, %s40
      %s60 = sphi 0, %s62
      %s63 = sphi 0, %s60
      %s64 = sphi 0, %s63
      %s80 = sphi 0, %s64
      %s86 = sphi 0, %s88
      %s89 = sphi 0, %s86
      %s90 = sphi 0, %s89
      %s106 = sphi 0, %s90
      %s112 = sphi 0, %s114
      %s115 = sphi 0, %s112
      %s116 = sphi 0, %s115
      %s132 = sphi 0, %s116
      %s138 = sphi 0, %s140
      %s141 = sphi 0, %s138
      %s142 = sphi 0, %s141
      %s158 = sphi 0, %s142
      %s164 = sphi 0, %s166
      %s167 = sphi 0, %s164
      %s168 = sphi 0, %s167
      %s184 = sphi 0, %s168
      %s190 = sphi 0, %s192
      %s193 = sphi 0, %s190
      %s194 = sphi 0, %s193
      %s210 = sphi 0, %s194
      %s216 = sphi 0, %s218
      %s219 = sphi 0, %s216
      %s220 = sphi 0, %s219
      %s236 = sphi 0, %s220
      %s242 = sphi 0, %s244
      %s245 = sphi 0, %s242
      %s246 = sphi 0, %s245
      %s262 = sphi 0, %s246
      %s268 = sphi 0, %s270
      %s271 = sphi 0, %s268
      %s272 = sphi 0, %s271
      %s288 = sphi 0, %s272
    $region4: #{ppo_loss.2} parent=1 // loop_header_branch
      %32 = sbr.rel (%p30) target = $region8
    $region5: #{ppo_loss.2} parent=1 // loop_body
      %s34 = ssub.s32 %s29, 1
      %s35 = ssub.s32 %s29, 2
      %s36 = sadd.s32 %s29, 1
      %s38 = sadd.s32 %s37, 1
      %p41 = scmp.eq.s32.totalorder %s29, 3
      %p42 = scmp.ne.s32.totalorder %s37, %s39
      %p43 = scmp.eq.s32.totalorder %s29, 0
      %p44 = por %p42, %p43
      %p45 = scmp.ne.s32.totalorder %s37, %s39
      %p46 = scmp.eq.s32.totalorder %s34, 3
      %p47 = por %p45, %p46
      %p48 = scmp.ne.s32.totalorder %s39, %s40
      %p49 = scmp.eq.s32.totalorder %s34, 0
      %p50 = por %p48, %p49
      %p51 = scmp.ne.s32.totalorder %s39, %s40
      %p52 = scmp.eq.s32.totalorder %s35, 3
      %p53 = por %p51, %p52
      %p55 = scmp.ne.s32.totalorder %s40, %s54
      %p56 = scmp.eq.s32.totalorder %s35, 0
      %p57 = por %p55, %p56
      %s58 = ssub.s32 %s29, %s36
      %p59 = scmp.eq.s32.totalorder %s58, 0
      %s61 = sadd.s32 %s60, 1
      %s62 = scalar_select %p59, %s60, %s61
      %p65 = pneg %p59
      %p66 = scmp.eq.s32.totalorder %s29, 3
      %p67 = por %p65, %p66
      %p68 = scmp.ne.s32.totalorder %s60, %s63
      %p69 = scmp.eq.s32.totalorder %s29, 0
      %p70 = por %p68, %p69
      %p71 = scmp.ne.s32.totalorder %s60, %s63
      %p72 = scmp.eq.s32.totalorder %s34, 3
      %p73 = por %p71, %p72
      %p74 = scmp.ne.s32.totalorder %s63, %s64
      %p75 = scmp.eq.s32.totalorder %s34, 0
      %p76 = por %p74, %p75
      %p77 = scmp.ne.s32.totalorder %s63, %s64
      %p78 = scmp.eq.s32.totalorder %s35, 3
      %p79 = por %p77, %p78
      %p81 = scmp.ne.s32.totalorder %s64, %s80
      %p82 = scmp.eq.s32.totalorder %s35, 0
      %p83 = por %p81, %p82
      %s84 = ssub.s32 %s29, %s36
      %p85 = scmp.eq.s32.totalorder %s84, 0
      %s87 = sadd.s32 %s86, 1
      %s88 = scalar_select %p85, %s86, %s87
      %p91 = pneg %p85
      %p92 = scmp.eq.s32.totalorder %s29, 3
      %p93 = por %p91, %p92
      %p94 = scmp.ne.s32.totalorder %s86, %s89
      %p95 = scmp.eq.s32.totalorder %s29, 0
      %p96 = por %p94, %p95
      %p97 = scmp.ne.s32.totalorder %s86, %s89
      %p98 = scmp.eq.s32.totalorder %s34, 3
      %p99 = por %p97, %p98
      %p100 = scmp.ne.s32.totalorder %s89, %s90
      %p101 = scmp.eq.s32.totalorder %s34, 0
      %p102 = por %p100, %p101
      %p103 = scmp.ne.s32.totalorder %s89, %s90
      %p104 = scmp.eq.s32.totalorder %s35, 3
      %p105 = por %p103, %p104
      %p107 = scmp.ne.s32.totalorder %s90, %s106
      %p108 = scmp.eq.s32.totalorder %s35, 0
      %p109 = por %p107, %p108
      %s110 = ssub.s32 %s29, %s36
      %p111 = scmp.eq.s32.totalorder %s110, 0
      %s113 = sadd.s32 %s112, 1
      %s114 = scalar_select %p111, %s112, %s113
      %p117 = pneg %p111
      %p118 = scmp.eq.s32.totalorder %s29, 3
      %p119 = por %p117, %p118
      %p120 = scmp.ne.s32.totalorder %s112, %s115
      %p121 = scmp.eq.s32.totalorder %s29, 0
      %p122 = por %p120, %p121
      %p123 = scmp.ne.s32.totalorder %s112, %s115
      %p124 = scmp.eq.s32.totalorder %s34, 3
      %p125 = por %p123, %p124
      %p126 = scmp.ne.s32.totalorder %s115, %s116
      %p127 = scmp.eq.s32.totalorder %s34, 0
      %p128 = por %p126, %p127
      %p129 = scmp.ne.s32.totalorder %s115, %s116
      %p130 = scmp.eq.s32.totalorder %s35, 3
      %p131 = por %p129, %p130
      %p133 = scmp.ne.s32.totalorder %s116, %s132
      %p134 = scmp.eq.s32.totalorder %s35, 0
      %p135 = por %p133, %p134
      %s136 = ssub.s32 %s29, %s36
      %p137 = scmp.eq.s32.totalorder %s136, 0
      %s139 = sadd.s32 %s138, 1
      %s140 = scalar_select %p137, %s138, %s139
      %p143 = pneg %p137
      %p144 = scmp.eq.s32.totalorder %s29, 3
      %p145 = por %p143, %p144
      %p146 = scmp.ne.s32.totalorder %s138, %s141
      %p147 = scmp.eq.s32.totalorder %s29, 0
      %p148 = por %p146, %p147
      %p149 = scmp.ne.s32.totalorder %s138, %s141
      %p150 = scmp.eq.s32.totalorder %s34, 3
      %p151 = por %p149, %p150
      %p152 = scmp.ne.s32.totalorder %s141, %s142
      %p153 = scmp.eq.s32.totalorder %s34, 0
      %p154 = por %p152, %p153
      %p155 = scmp.ne.s32.totalorder %s141, %s142
      %p156 = scmp.eq.s32.totalorder %s35, 3
      %p157 = por %p155, %p156
      %p159 = scmp.ne.s32.totalorder %s142, %s158
      %p160 = scmp.eq.s32.totalorder %s35, 0
      %p161 = por %p159, %p160
      %s162 = ssub.s32 %s29, %s36
      %p163 = scmp.eq.s32.totalorder %s162, 0
      %s165 = sadd.s32 %s164, 1
      %s166 = scalar_select %p163, %s164, %s165
      %p169 = pneg %p163
      %p170 = scmp.eq.s32.totalorder %s29, 3
      %p171 = por %p169, %p170
      %p172 = scmp.ne.s32.totalorder %s164, %s167
      %p173 = scmp.eq.s32.totalorder %s29, 0
      %p174 = por %p172, %p173
      %p175 = scmp.ne.s32.totalorder %s164, %s167
      %p176 = scmp.eq.s32.totalorder %s34, 3
      %p177 = por %p175, %p176
      %p178 = scmp.ne.s32.totalorder %s167, %s168
      %p179 = scmp.eq.s32.totalorder %s34, 0
      %p180 = por %p178, %p179
      %p181 = scmp.ne.s32.totalorder %s167, %s168
      %p182 = scmp.eq.s32.totalorder %s35, 3
      %p183 = por %p181, %p182
      %p185 = scmp.ne.s32.totalorder %s168, %s184
      %p186 = scmp.eq.s32.totalorder %s35, 0
      %p187 = por %p185, %p186
      %s188 = ssub.s32 %s29, %s36
      %p189 = scmp.eq.s32.totalorder %s188, 0
      %s191 = sadd.s32 %s190, 1
      %s192 = scalar_select %p189, %s190, %s191
      %p195 = pneg %p189
      %p196 = scmp.eq.s32.totalorder %s29, 3
      %p197 = por %p195, %p196
      %p198 = scmp.ne.s32.totalorder %s190, %s193
      %p199 = scmp.eq.s32.totalorder %s29, 0
      %p200 = por %p198, %p199
      %p201 = scmp.ne.s32.totalorder %s190, %s193
      %p202 = scmp.eq.s32.totalorder %s34, 3
      %p203 = por %p201, %p202
      %p204 = scmp.ne.s32.totalorder %s193, %s194
      %p205 = scmp.eq.s32.totalorder %s34, 0
      %p206 = por %p204, %p205
      %p207 = scmp.ne.s32.totalorder %s193, %s194
      %p208 = scmp.eq.s32.totalorder %s35, 3
      %p209 = por %p207, %p208
      %p211 = scmp.ne.s32.totalorder %s194, %s210
      %p212 = scmp.eq.s32.totalorder %s35, 0
      %p213 = por %p211, %p212
      %s214 = ssub.s32 %s29, %s36
      %p215 = scmp.eq.s32.totalorder %s214, 0
      %s217 = sadd.s32 %s216, 1
      %s218 = scalar_select %p215, %s216, %s217
      %p221 = pneg %p215
      %p222 = scmp.eq.s32.totalorder %s29, 3
      %p223 = por %p221, %p222
      %p224 = scmp.ne.s32.totalorder %s216, %s219
      %p225 = scmp.eq.s32.totalorder %s29, 0
      %p226 = por %p224, %p225
      %p227 = scmp.ne.s32.totalorder %s216, %s219
      %p228 = scmp.eq.s32.totalorder %s34, 3
      %p229 = por %p227, %p228
      %p230 = scmp.ne.s32.totalorder %s219, %s220
      %p231 = scmp.eq.s32.totalorder %s34, 0
      %p232 = por %p230, %p231
      %p233 = scmp.ne.s32.totalorder %s219, %s220
      %p234 = scmp.eq.s32.totalorder %s35, 3
      %p235 = por %p233, %p234
      %p237 = scmp.ne.s32.totalorder %s220, %s236
      %p238 = scmp.eq.s32.totalorder %s35, 0
      %p239 = por %p237, %p238
      %s240 = ssub.s32 %s29, %s36
      %p241 = scmp.eq.s32.totalorder %s240, 0
      %s243 = sadd.s32 %s242, 1
      %s244 = scalar_select %p241, %s242, %s243
      %p247 = pneg %p241
      %p248 = scmp.eq.s32.totalorder %s29, 3
      %p249 = por %p247, %p248
      %p250 = scmp.ne.s32.totalorder %s242, %s245
      %p251 = scmp.eq.s32.totalorder %s29, 0
      %p252 = por %p250, %p251
      %p253 = scmp.ne.s32.totalorder %s242, %s245
      %p254 = scmp.eq.s32.totalorder %s34, 3
      %p255 = por %p253, %p254
      %p256 = scmp.ne.s32.totalorder %s245, %s246
      %p257 = scmp.eq.s32.totalorder %s34, 0
      %p258 = por %p256, %p257
      %p259 = scmp.ne.s32.totalorder %s245, %s246
      %p260 = scmp.eq.s32.totalorder %s35, 3
      %p261 = por %p259, %p260
      %p263 = scmp.ne.s32.totalorder %s246, %s262
      %p264 = scmp.eq.s32.totalorder %s35, 0
      %p265 = por %p263, %p264
      %s266 = ssub.s32 %s29, %s36
      %p267 = scmp.eq.s32.totalorder %s266, 0
      %s269 = sadd.s32 %s268, 1
      %s270 = scalar_select %p267, %s268, %s269
      %p273 = pneg %p267
      %p274 = scmp.eq.s32.totalorder %s29, 3
      %p275 = por %p273, %p274
      %p276 = scmp.ne.s32.totalorder %s268, %s271
      %p277 = scmp.eq.s32.totalorder %s29, 0
      %p278 = por %p276, %p277
      %p279 = scmp.ne.s32.totalorder %s268, %s271
      %p280 = scmp.eq.s32.totalorder %s34, 3
      %p281 = por %p279, %p280
      %p282 = scmp.ne.s32.totalorder %s271, %s272
      %p283 = scmp.eq.s32.totalorder %s34, 0
      %p284 = por %p282, %p283
      %p285 = scmp.ne.s32.totalorder %s271, %s272
      %p286 = scmp.eq.s32.totalorder %s35, 3
      %p287 = por %p285, %p286
      %p289 = scmp.ne.s32.totalorder %s272, %s288
      %p290 = scmp.eq.s32.totalorder %s35, 0
      %p291 = por %p289, %p290
      %p292 = scmp.le.s32.totalorder 1, %s29
      %p293 = scmp.lt.s32.totalorder %s29, 5
      %p294 = pnand %p292, %p293
      %p295 = pneg %p294
      // Predicated region
      $region9: #{ppo_loss.2} parent=5 // pred_check
        _
      $region10: #{ppo_loss.2} parent=5 // pred_check_branch
        %297 = sbr.rel (%p294) target = $region12
      $region11: #{ppo_loss.2} parent=5 // pred_region
        %s298 = ssub.s32 %s29, 1
        // Predicated region
        $region13: #{ppo_loss.2} parent=11 // pred_check
          %p299 = pneg %p50
        $region14: #{ppo_loss.2} parent=11 // pred_check_branch
          %301 = sbr.rel (%p299) target = $region16
        $region15: #{ppo_loss.2} parent=11 // pred_region
          _
        $region16: #{ppo_loss.2} parent=11 // pred_fallthru
          _
      $region12: #{ppo_loss.2} parent=5 // pred_fallthru
        _
      %p302 = scmp.lt.s32.totalorder %s29, 4
      // Predicated region
      $region17: #{ppo_loss.2} parent=5 // pred_check
        %p303 = pneg %p302
      $region18: #{ppo_loss.2} parent=5 // pred_check_branch
        %305 = sbr.rel (%p303) target = $region20
      $region19: #{ppo_loss.2} parent=5 // pred_region
        // Predicated region
        $region21: #{ppo_loss.2} parent=19 // pred_check
          %p306 = pneg %p70
        $region22: #{ppo_loss.2} parent=19 // pred_check_branch
          %308 = sbr.rel (%p306) target = $region24
        $region23: #{ppo_loss.2} parent=19 // pred_region
          %s309 = sand.u32 %s60, 1
          %s310 = scalar_lea.sflag [#allocation4], %s309
          %s311 = sand.u32 %s60, 1
          %s312 = smul.addr %s311, 32
          %s313 = scalar_lea.vmem [#allocation3], %s312
          %s314 = smul.u32 4, %s29
          %s316 = ssub.s32 512, 512
          %317 = vsyncadd %s310, %s316
          %s318 = smul.addr %s314, 128
          %s319 = scalar_lea.hbm %s1, %s318
          %s320 = sshll.u32 %s313, 4
          %s321 = int_to_ptr.vmem [resolvable:$true] %s320
          %326 = dma.hbm_to_vmem [thread:$0]  %s319, 512, %s321, %s310, 128, 128, 8
        $region24: #{ppo_loss.2} parent=19 // pred_fallthru
          _
        // Predicated region
        $region25: #{ppo_loss.2} parent=19 // pred_check
          %p327 = pneg %p96
        $region26: #{ppo_loss.2} parent=19 // pred_check_branch
          %329 = sbr.rel (%p327) target = $region28
        $region27: #{ppo_loss.2} parent=19 // pred_region
          %s330 = sand.u32 %s29, 1
          %s331 = scalar_lea.sflag [#allocation6], %s330
          %s332 = sand.u32 %s86, 1
          %s333 = smul.addr %s332, 32
          %s334 = scalar_lea.vmem [#allocation5], %s333
          %s335 = smul.u32 4, %s29
          %s337 = ssub.s32 512, 512
          %338 = vsyncadd %s331, %s337
          %s339 = smul.addr %s335, 128
          %s340 = scalar_lea.hbm %s2, %s339
          %s341 = sshll.u32 %s334, 4
          %s342 = int_to_ptr.vmem [resolvable:$true] %s341
          %347 = dma.hbm_to_vmem [thread:$0]  %s340, 512, %s342, %s331, 128, 128, 8
        $region28: #{ppo_loss.2} parent=19 // pred_fallthru
          _
        // Predicated region
        $region29: #{ppo_loss.2} parent=19 // pred_check
          %p348 = pneg %p122
        $region30: #{ppo_loss.2} parent=19 // pred_check_branch
          %350 = sbr.rel (%p348) target = $region32
        $region31: #{ppo_loss.2} parent=19 // pred_region
          %s351 = sand.u32 %s29, 1
          %s352 = scalar_lea.sflag [#allocation6], %s351
          %s353 = sand.u32 %s112, 1
          %s354 = smul.addr %s353, 32
          %s355 = scalar_lea.vmem [#allocation7], %s354
          %s356 = smul.u32 4, %s29
          %s358 = ssub.s32 512, 512
          %359 = vsyncadd %s352, %s358
          %s360 = smul.addr %s356, 128
          %s361 = scalar_lea.hbm %s3, %s360
          %s362 = sshll.u32 %s355, 4
          %s363 = int_to_ptr.vmem [resolvable:$true] %s362
          %368 = dma.hbm_to_vmem [thread:$0]  %s361, 512, %s363, %s352, 128, 128, 8
        $region32: #{ppo_loss.2} parent=19 // pred_fallthru
          _
        // Predicated region
        $region33: #{ppo_loss.2} parent=19 // pred_check
          %p369 = pneg %p148
        $region34: #{ppo_loss.2} parent=19 // pred_check_branch
          %371 = sbr.rel (%p369) target = $region36
        $region35: #{ppo_loss.2} parent=19 // pred_region
          %s372 = sand.u32 %s29, 1
          %s373 = scalar_lea.sflag [#allocation9], %s372
          %s374 = sand.u32 %s138, 1
          %s375 = smul.addr %s374, 32
          %s376 = scalar_lea.vmem [#allocation8], %s375
          %s377 = smul.u32 4, %s29
          %s379 = ssub.s32 512, 512
          %380 = vsyncadd %s373, %s379
          %s381 = smul.addr %s377, 128
          %s382 = scalar_lea.hbm %s4, %s381
          %s383 = sshll.u32 %s376, 4
          %s384 = int_to_ptr.vmem [resolvable:$true] %s383
          %389 = dma.hbm_to_vmem [thread:$0]  %s382, 512, %s384, %s373, 128, 128, 8
        $region36: #{ppo_loss.2} parent=19 // pred_fallthru
          _
        // Predicated region
        $region37: #{ppo_loss.2} parent=19 // pred_check
          %p390 = pneg %p174
        $region38: #{ppo_loss.2} parent=19 // pred_check_branch
          %392 = sbr.rel (%p390) target = $region40
        $region39: #{ppo_loss.2} parent=19 // pred_region
          %s393 = sand.u32 %s29, 1
          %s394 = scalar_lea.sflag [#allocation9], %s393
          %s395 = sand.u32 %s164, 1
          %s396 = smul.addr %s395, 32
          %s397 = scalar_lea.vmem [#allocation10], %s396
          %s398 = smul.u32 4, %s29
          %s400 = ssub.s32 512, 512
          %401 = vsyncadd %s394, %s400
          %s402 = smul.addr %s398, 128
          %s403 = scalar_lea.hbm %s5, %s402
          %s404 = sshll.u32 %s397, 4
          %s405 = int_to_ptr.vmem [resolvable:$true] %s404
          %410 = dma.hbm_to_vmem [thread:$0]  %s403, 512, %s405, %s394, 128, 128, 8
        $region40: #{ppo_loss.2} parent=19 // pred_fallthru
          _
        // Predicated region
        $region41: #{ppo_loss.2} parent=19 // pred_check
          %p411 = pneg %p200
        $region42: #{ppo_loss.2} parent=19 // pred_check_branch
          %413 = sbr.rel (%p411) target = $region44
        $region43: #{ppo_loss.2} parent=19 // pred_region
          %s414 = sand.u32 %s29, 1
          %s415 = scalar_lea.sflag [#allocation12], %s414
          %s416 = sand.u32 %s190, 1
          %s417 = smul.addr %s416, 32
          %s418 = scalar_lea.vmem [#allocation11], %s417
          %s419 = smul.u32 4, %s29
          %s421 = ssub.s32 512, 512
          %422 = vsyncadd %s415, %s421
          %s423 = smul.addr %s419, 128
          %s424 = scalar_lea.hbm %s6, %s423
          %s425 = sshll.u32 %s418, 4
          %s426 = int_to_ptr.vmem [resolvable:$true] %s425
          %431 = dma.hbm_to_vmem [thread:$0]  %s424, 512, %s426, %s415, 128, 128, 8
        $region44: #{ppo_loss.2} parent=19 // pred_fallthru
          _
        // Predicated region
        $region45: #{ppo_loss.2} parent=19 // pred_check
          %p432 = pneg %p226
        $region46: #{ppo_loss.2} parent=19 // pred_check_branch
          %434 = sbr.rel (%p432) target = $region48
        $region47: #{ppo_loss.2} parent=19 // pred_region
          %s435 = sand.u32 %s29, 1
          %s436 = scalar_lea.sflag [#allocation12], %s435
          %s437 = sand.u32 %s216, 1
          %s438 = smul.addr %s437, 32
          %s439 = scalar_lea.vmem [#allocation13], %s438
          %s440 = smul.u32 4, %s29
          %s442 = ssub.s32 512, 512
          %443 = vsyncadd %s436, %s442
          %s444 = smul.addr %s440, 128
          %s445 = scalar_lea.hbm %s7, %s444
          %s446 = sshll.u32 %s439, 4
          %s447 = int_to_ptr.vmem [resolvable:$true] %s446
          %452 = dma.hbm_to_vmem [thread:$0]  %s445, 512, %s447, %s436, 128, 128, 8
        $region48: #{ppo_loss.2} parent=19 // pred_fallthru
          _
      $region20: #{ppo_loss.2} parent=5 // pred_fallthru
        _
      %p453 = scmp.le.s32.totalorder 1, %s29
      %p454 = scmp.lt.s32.totalorder %s29, 5
      %p455 = pnand %p453, %p454
      %p456 = pneg %p455
      // Predicated region
      $region49: #{ppo_loss.2} parent=5 // pred_check
        _
      $region50: #{ppo_loss.2} parent=5 // pred_check_branch
        %458 = sbr.rel (%p455) target = $region52
      $region51: #{ppo_loss.2} parent=5 // pred_region
        %s459 = ssub.s32 %s29, 1
        %s460 = sand.u32 %s63, 1
        %s461 = scalar_lea.sflag [#allocation4], %s460
        %s462 = sand.u32 %s63, 1
        %s463 = smul.addr %s462, 32
        %s464 = scalar_lea.vmem [#allocation3], %s463
        // Predicated region
        $region53: #{ppo_loss.2} parent=51 // pred_check
          %p465 = pneg %p76
        $region54: #{ppo_loss.2} parent=51 // pred_check_branch
          %467 = sbr.rel (%p465) target = $region56
        $region55: #{ppo_loss.2} parent=51 // pred_region
          %468 = dma.done %s461, 512
        $region56: #{ppo_loss.2} parent=51 // pred_fallthru
          _
        %s469 = sand.u32 %s34, 1
        %s470 = scalar_lea.sflag [#allocation6], %s469
        %s471 = sand.u32 %s89, 1
        %s472 = smul.addr %s471, 32
        %s473 = scalar_lea.vmem [#allocation5], %s472
        // Predicated region
        $region57: #{ppo_loss.2} parent=51 // pred_check
          %p474 = pneg %p102
        $region58: #{ppo_loss.2} parent=51 // pred_check_branch
          %476 = sbr.rel (%p474) target = $region60
        $region59: #{ppo_loss.2} parent=51 // pred_region
          %477 = dma.done %s470, 512
        $region60: #{ppo_loss.2} parent=51 // pred_fallthru
          _
        %s478 = sand.u32 %s34, 1
        %s479 = scalar_lea.sflag [#allocation6], %s478
        %s480 = sand.u32 %s115, 1
        %s481 = smul.addr %s480, 32
        %s482 = scalar_lea.vmem [#allocation7], %s481
        // Predicated region
        $region61: #{ppo_loss.2} parent=51 // pred_check
          %p483 = pneg %p128
        $region62: #{ppo_loss.2} parent=51 // pred_check_branch
          %485 = sbr.rel (%p483) target = $region64
        $region63: #{ppo_loss.2} parent=51 // pred_region
          %486 = dma.done %s479, 512
        $region64: #{ppo_loss.2} parent=51 // pred_fallthru
          _
        %s487 = sand.u32 %s34, 1
        %s488 = scalar_lea.sflag [#allocation9], %s487
        %s489 = sand.u32 %s141, 1
        %s490 = smul.addr %s489, 32
        %s491 = scalar_lea.vmem [#allocation8], %s490
        // Predicated region
        $region65: #{ppo_loss.2} parent=51 // pred_check
          %p492 = pneg %p154
        $region66: #{ppo_loss.2} parent=51 // pred_check_branch
          %494 = sbr.rel (%p492) target = $region68
        $region67: #{ppo_loss.2} parent=51 // pred_region
          %495 = dma.done %s488, 512
        $region68: #{ppo_loss.2} parent=51 // pred_fallthru
          _
        %s496 = sand.u32 %s34, 1
        %s497 = scalar_lea.sflag [#allocation9], %s496
        %s498 = sand.u32 %s167, 1
        %s499 = smul.addr %s498, 32
        %s500 = scalar_lea.vmem [#allocation10], %s499
        // Predicated region
        $region69: #{ppo_loss.2} parent=51 // pred_check
          %p501 = pneg %p180
        $region70: #{ppo_loss.2} parent=51 // pred_check_branch
          %503 = sbr.rel (%p501) target = $region72
        $region71: #{ppo_loss.2} parent=51 // pred_region
          %504 = dma.done %s497, 512
        $region72: #{ppo_loss.2} parent=51 // pred_fallthru
          _
        %s505 = sand.u32 %s34, 1
        %s506 = scalar_lea.sflag [#allocation12], %s505
        %s507 = sand.u32 %s193, 1
        %s508 = smul.addr %s507, 32
        %s509 = scalar_lea.vmem [#allocation11], %s508
        // Predicated region
        $region73: #{ppo_loss.2} parent=51 // pred_check
          %p510 = pneg %p206
        $region74: #{ppo_loss.2} parent=51 // pred_check_branch
          %512 = sbr.rel (%p510) target = $region76
        $region75: #{ppo_loss.2} parent=51 // pred_region
          %513 = dma.done %s506, 512
        $region76: #{ppo_loss.2} parent=51 // pred_fallthru
          _
        %s514 = sand.u32 %s34, 1
        %s515 = scalar_lea.sflag [#allocation12], %s514
        %s516 = sand.u32 %s219, 1
        %s517 = smul.addr %s516, 32
        %s518 = scalar_lea.vmem [#allocation13], %s517
        // Predicated region
        $region77: #{ppo_loss.2} parent=51 // pred_check
          %p519 = pneg %p232
        $region78: #{ppo_loss.2} parent=51 // pred_check_branch
          %521 = sbr.rel (%p519) target = $region80
        $region79: #{ppo_loss.2} parent=51 // pred_region
          %522 = dma.done %s515, 512
        $region80: #{ppo_loss.2} parent=51 // pred_fallthru
          _
        %p523 = pneg %p50
        %p524 = pneg %p47
        %s525 = sand.u32 %s63, 1
        %s526 = scalar_lea.sflag [#allocation4], %s525
        %s527 = sand.u32 %s63, 1
        %s528 = smul.addr %s527, 32
        %s529 = scalar_lea.vmem [#allocation3], %s528
        %p530 = pneg %p76
        %p531 = pneg %p73
        %s532 = sand.u32 %s34, 1
        %s533 = scalar_lea.sflag [#allocation6], %s532
        %s534 = sand.u32 %s89, 1
        %s535 = smul.addr %s534, 32
        %s536 = scalar_lea.vmem [#allocation5], %s535
        %p537 = pneg %p102
        %p538 = pneg %p99
        %s539 = sand.u32 %s34, 1
        %s540 = scalar_lea.sflag [#allocation6], %s539
        %s541 = sand.u32 %s115, 1
        %s542 = smul.addr %s541, 32
        %s543 = scalar_lea.vmem [#allocation7], %s542
        %p544 = pneg %p128
        %p545 = pneg %p125
        %s546 = sand.u32 %s34, 1
        %s547 = scalar_lea.sflag [#allocation9], %s546
        %s548 = sand.u32 %s141, 1
        %s549 = smul.addr %s548, 32
        %s550 = scalar_lea.vmem [#allocation8], %s549
        %p551 = pneg %p154
        %p552 = pneg %p151
        %s553 = sand.u32 %s34, 1
        %s554 = scalar_lea.sflag [#allocation9], %s553
        %s555 = sand.u32 %s167, 1
        %s556 = smul.addr %s555, 32
        %s557 = scalar_lea.vmem [#allocation10], %s556
        %p558 = pneg %p180
        %p559 = pneg %p177
        %s560 = sand.u32 %s34, 1
        %s561 = scalar_lea.sflag [#allocation12], %s560
        %s562 = sand.u32 %s193, 1
        %s563 = smul.addr %s562, 32
        %s564 = scalar_lea.vmem [#allocation11], %s563
        %p565 = pneg %p206
        %p566 = pneg %p203
        %s567 = sand.u32 %s34, 1
        %s568 = scalar_lea.sflag [#allocation12], %s567
        %s569 = sand.u32 %s219, 1
        %s570 = smul.addr %s569, 32
        %s571 = scalar_lea.vmem [#allocation13], %s570
        %p572 = pneg %p232
        %p573 = pneg %p229
        %p574 = pneg %p258
        %p575 = pneg %p255
        %s576 = smul.u32 4, %s34
        %p577 = scmp.lt.s32.totalorder %s576, 15
        %s578 = scalar_select %p577, %s576, 15
        %s579 = smul.addr %s578, 2
        %s580 = scalar_lea.vmem %s8, %s579
        %p581 = pneg %p284
        %p582 = pneg %p281
        %p583 = scmp.lt.s32.totalorder %s34, 3
        %s584 = scalar_select %p583, %s34, 3
        %s585 = smul.addr %s584, 8
        %s586 = scalar_lea.vmem %s9, %s585
        %s587 = smul.u32 4, %s34
        %s588 = smul.u32 4, %s34
        %s589 = smul.u32 4, %s34
        %s590 = smul.u32 4, %s34
        %s591 = smul.u32 4, %s34
        %s592 = smul.u32 4, %s34
        %s593 = smul.u32 4, %s34
        %s594 = smul.u32 4, %s34
        %p595 = scmp.lt.s32.totalorder %s594, 15
        %s596 = scalar_select %p595, %s594, 15
        %s597 = smul.addr %s596, 2
        %s598 = scalar_lea.vmem %s8, %s597
        %s599 = smul.u32 4, %s34
        %p600 = scmp.lt.s32.totalorder %s34, 3
        %s601 = scalar_select %p600, %s34, 3
        %s602 = smul.addr %s601, 8
        %s603 = scalar_lea.vmem %s9, %s602
        %v606 = vld [vmem:[%s464] sm:$0xff]
        %v607 = vld [vmem:[%s464 + $0x8] sm:$0xff]
        %v608 = vld [vmem:[%s464 + $0x10] sm:$0xff]
        %v609 = vld [vmem:[%s464 + $0x18] sm:$0xff]
        %v610 = vld [vmem:[%s473] sm:$0xff]
        %v611 = vld [vmem:[%s473 + $0x8] sm:$0xff]
        %v612 = vld [vmem:[%s473 + $0x10] sm:$0xff]
        %v613 = vld [vmem:[%s473 + $0x18] sm:$0xff]
        %v614 = vld [vmem:[%s482] sm:$0xff]
        %v615 = vld [vmem:[%s482 + $0x8] sm:$0xff]
        %v616 = vld [vmem:[%s482 + $0x10] sm:$0xff]
        %v617 = vld [vmem:[%s482 + $0x18] sm:$0xff]
        %v618 = vld [vmem:[%s491] sm:$0xff]
        %v619 = vld [vmem:[%s491 + $0x8] sm:$0xff]
        %v620 = vld [vmem:[%s491 + $0x10] sm:$0xff]
        %v621 = vld [vmem:[%s491 + $0x18] sm:$0xff]
        %v622 = vld [vmem:[%s500] sm:$0xff]
        %v623 = vld [vmem:[%s500 + $0x8] sm:$0xff]
        %v624 = vld [vmem:[%s500 + $0x10] sm:$0xff]
        %v625 = vld [vmem:[%s500 + $0x18] sm:$0xff]
        %v626 = vld [vmem:[%s509] sm:$0xff]
        %v627 = vld [vmem:[%s509 + $0x8] sm:$0xff]
        %v628 = vld [vmem:[%s509 + $0x10] sm:$0xff]
        %v629 = vld [vmem:[%s509 + $0x18] sm:$0xff]
        %v630 = vld [vmem:[%s518] sm:$0xff]
        %v631 = vld [vmem:[%s518 + $0x8] sm:$0xff]
        %v632 = vld [vmem:[%s518 + $0x10] sm:$0xff]
        %v633 = vld [vmem:[%s518 + $0x18] sm:$0xff]
        %v634 = vsub.f32 %v622, %v618
        %v635 = vsub.f32 %v623, %v619
        %v636 = vsub.f32 %v624, %v620
        %v637 = vsub.f32 %v625, %v621
        %v638 = vmul.f32 %v634, 1.442695
        %v639 = vpow.pop %v638
        %v640 = vmul.f32 %v635, 1.442695
        %v641 = vpow.pop %v640
        %v642 = vmul.f32 %v636, 1.442695
        %v643 = vpow.pop %v642
        %v644 = vmul.f32 %v637, 1.442695
        %v645 = vpow.pop %v644
        %v646 = vsub.f32 %v639, 1.0
        %v647 = vsub.f32 %v641, 1.0
        %v648 = vsub.f32 %v643, 1.0
        %v649 = vsub.f32 %v645, 1.0
        %v650 = vand.u32 2147483647, %v646
        %v651 = vand.u32 2147483647, %v647
        %v652 = vand.u32 2147483647, %v648
        %v653 = vand.u32 2147483647, %v649
        %vm654 = vcmp.gt.f32.partialorder %v650, 0.2
        %vm655 = vcmp.gt.f32.partialorder %v651, 0.2
        %vm656 = vcmp.gt.f32.partialorder %v652, 0.2
        %vm657 = vcmp.gt.f32.partialorder %v653, 0.2
        %vm658 = vmpackc.low %vm655, %vm654
        %vm659 = vmpackc.low %vm657, %vm656
        %vm660 = vmpackc.even %vm659, %vm658
        %v661 = vsel %vm660, 16843009, 0
        %v662 = vunpack.c.0.s8 %v661
        %v663 = vunpack.c.1.s8 %v661
        %v664 = vunpack.c.2.s8 %v661
        %v665 = vunpack.c.3.s8 %v661
        %v666 = vpack.c.b16 %v662, %v662
        %v667 = vpack.c.b8 %v666, %v666
        %v668 = vpack.c.b16 %v663, %v663
        %v669 = vpack.c.b8 %v668, %v668
        %v670 = vpack.c.b16 %v664, %v664
        %v671 = vpack.c.b8 %v670, %v670
        %v672 = vpack.c.b16 %v665, %v665
        %v673 = vpack.c.b8 %v672, %v672
        %674 = vst [vmem:[%s598] sm:$0x3] %v667
        %675 = vst [vmem:[%s598 + $0x2] sm:$0x3] %v669
        %676 = vst [vmem:[%s598 + $0x4] sm:$0x3] %v671
        %677 = vst [vmem:[%s598 + $0x6] sm:$0x3] %v673
        %v678 = vsub.f32 %v630, %v606
        %v679 = vsub.f32 %v631, %v607
        %v680 = vsub.f32 %v632, %v608
        %v681 = vsub.f32 %v633, %v609
        %v682 = vmul.f32 %v678, %v678
        %v683 = vmul.f32 %v679, %v679
        %v684 = vmul.f32 %v680, %v680
        %v685 = vmul.f32 %v681, %v681
        %v686 = vsub.f32 %v630, %v610
        %v687 = vsub.f32 %v631, %v611
        %v688 = vsub.f32 %v632, %v612
        %v689 = vsub.f32 %v633, %v613
        %v690 = vmax.f32 %v686, -0.2
        %v691 = vmax.f32 %v687, -0.2
        %v692 = vmax.f32 %v688, -0.2
        %v693 = vmax.f32 %v689, -0.2
        %v694 = vmin.f32 %v690, 0.2
        %v695 = vmin.f32 %v691, 0.2
        %v696 = vmin.f32 %v692, 0.2
        %v697 = vmin.f32 %v693, 0.2
        %v698 = vadd.f32 %v610, %v694
        %v699 = vadd.f32 %v611, %v695
        %v700 = vadd.f32 %v612, %v696
        %v701 = vadd.f32 %v613, %v697
        %v702 = vsub.f32 %v698, %v606
        %v703 = vsub.f32 %v699, %v607
        %v704 = vsub.f32 %v700, %v608
        %v705 = vsub.f32 %v701, %v609
        %v706 = vmul.f32 %v702, %v702
        %v707 = vmul.f32 %v703, %v703
        %v708 = vmul.f32 %v704, %v704
        %v709 = vmul.f32 %v705, %v705
        %v710 = vmax.f32 %v682, %v706
        %v711 = vmax.f32 %v683, %v707
        %v712 = vmax.f32 %v684, %v708
        %v713 = vmax.f32 %v685, %v709
        %s714 = sld [smem:[#allocation2]]
        %v715 = vstv %s714
        %v716 = vsub.f32 %v614, %v715
        %v717 = vsub.f32 %v615, %v715
        %v718 = vsub.f32 %v616, %v715
        %v719 = vsub.f32 %v617, %v715
        %v720 = vmul.f32 %v716, %v716
        %v721 = vmul.f32 %v717, %v717
        %v722 = vmul.f32 %v718, %v718
        %v723 = vmul.f32 %v719, %v719
        %v724 = vadd.f32 %v634, %v635
        %v725 = vadd.f32 %v724, %v636
        %v726 = vadd.f32 %v725, %v637
        %v727 = vrot.slane %v726, 4
        %v728 = vadd.f32 %v726, %v727
        %v729 = vrot.slane %v728, 2
        %v730 = vadd.f32 %v728, %v729
        %v731 = vrot.slane %v730, 1
        %v732 = vadd.f32 %v730, %v731
        %v733 = vadd.f32 %v639, %v641
        %v734 = vadd.f32 %v733, %v643
        %v735 = vadd.f32 %v734, %v645
        %v736 = vrot.slane %v735, 4
        %v737 = vadd.f32 %v735, %v736
        %v738 = vrot.slane %v737, 2
        %v739 = vadd.f32 %v737, %v738
        %v740 = vrot.slane %v739, 1
        %v741 = vadd.f32 %v739, %v740
        %v742 = vadd.f32 %v716, %v717
        %v743 = vadd.f32 %v742, %v718
        %v744 = vadd.f32 %v743, %v719
        %v745 = vrot.slane %v744, 4
        %v746 = vadd.f32 %v744, %v745
        %v747 = vrot.slane %v746, 2
        %v748 = vadd.f32 %v746, %v747
        %v749 = vrot.slane %v748, 1
        %v750 = vadd.f32 %v748, %v749
        %v751 = vadd.f32 %v720, %v721
        %v752 = vadd.f32 %v751, %v722
        %v753 = vadd.f32 %v752, %v723
        %v754 = vrot.slane %v753, 4
        %v755 = vadd.f32 %v753, %v754
        %v756 = vrot.slane %v755, 2
        %v757 = vadd.f32 %v755, %v756
        %v758 = vrot.slane %v757, 1
        %v759 = vadd.f32 %v757, %v758
        %v760 = vadd.f32 %v626, %v627
        %v761 = vadd.f32 %v760, %v628
        %v762 = vadd.f32 %v761, %v629
        %v763 = vrot.slane %v762, 4
        %v764 = vadd.f32 %v762, %v763
        %v765 = vrot.slane %v764, 2
        %v766 = vadd.f32 %v764, %v765
        %v767 = vrot.slane %v766, 1
        %v768 = vadd.f32 %v766, %v767
        %v769 = vadd.f32 %v710, %v711
        %v770 = vadd.f32 %v769, %v712
        %v771 = vadd.f32 %v770, %v713
        %v772 = vrot.slane %v771, 4
        %v773 = vadd.f32 %v771, %v772
        %v774 = vrot.slane %v773, 2
        %v775 = vadd.f32 %v773, %v774
        %v776 = vrot.slane %v775, 1
        %v777 = vadd.f32 %v775, %v776
        %v778 = vlaneseq
        %v779 = vshrl.u32 %v778, 7
        %vm780 = vcmp.eq.s32.totalorder %v779, 0
        %v781 = vsel %vm780, %v732, 0.0
        %vm782 = vcmp.eq.s32.totalorder %v779, 1
        %v783 = vsel %vm782, %v741, %v781
        %vm784 = vcmp.eq.s32.totalorder %v779, 2
        %v785 = vsel %vm784, %v750, %v783
        %vm786 = vcmp.eq.s32.totalorder %v779, 3
        %v787 = vsel %vm786, %v759, %v785
        %vm788 = vcmp.eq.s32.totalorder %v779, 4
        %v789 = vsel %vm788, %v768, %v787
        %vm790 = vcmp.eq.s32.totalorder %v779, 5
        %v791 = vsel %vm790, %v777, %v789
        %792 = vst [vmem:[%s603] sm:$0xff] %v791
        %s793 = smul.u32 4, %s34
        %p794 = scmp.lt.s32.totalorder %s793, 15
        %s795 = scalar_select %p794, %s793, 15
        %s796 = smul.addr %s795, 2
        %s797 = scalar_lea.vmem %s8, %s796
        %p798 = scmp.lt.s32.totalorder %s34, 3
        %s799 = scalar_select %p798, %s34, 3
        %s800 = smul.addr %s799, 8
        %s801 = scalar_lea.vmem %s9, %s800
        // Predicated region
        $region81: #{ppo_loss.2} parent=51 // pred_check
          %p802 = pneg %p255
        $region82: #{ppo_loss.2} parent=51 // pred_check_branch
          %804 = sbr.rel (%p802) target = $region84
        $region83: #{ppo_loss.2} parent=51 // pred_region
          %s805 = smul.u32 4, %s34
        $region84: #{ppo_loss.2} parent=51 // pred_fallthru
          _
        // Predicated region
        $region85: #{ppo_loss.2} parent=51 // pred_check
          %p806 = pneg %p281
        $region86: #{ppo_loss.2} parent=51 // pred_check_branch
          %808 = sbr.rel (%p806) target = $region88
        $region87: #{ppo_loss.2} parent=51 // pred_region
          _
        $region88: #{ppo_loss.2} parent=51 // pred_fallthru
          _
      $region52: #{ppo_loss.2} parent=5 // pred_fallthru
        _
      %p809 = scmp.le.s32.totalorder 2, %s29
      // Predicated region
      $region89: #{ppo_loss.2} parent=5 // pred_check
        %p810 = pneg %p809
      $region90: #{ppo_loss.2} parent=5 // pred_check_branch
        %812 = sbr.rel (%p810) target = $region92
      $region91: #{ppo_loss.2} parent=5 // pred_region
        %s813 = ssub.s32 %s29, 2
        // Predicated region
        $region93: #{ppo_loss.2} parent=91 // pred_check
          %p814 = pneg %p261
        $region94: #{ppo_loss.2} parent=91 // pred_check_branch
          %816 = sbr.rel (%p814) target = $region96
        $region95: #{ppo_loss.2} parent=91 // pred_region
          %s817 = smul.u32 4, %s35
          %p818 = scmp.lt.s32.totalorder %s817, 15
          %s819 = scalar_select %p818, %s817, 15
          %s820 = smul.addr %s819, 2
          %s821 = scalar_lea.vmem %s8, %s820
        $region96: #{ppo_loss.2} parent=91 // pred_fallthru
          _
        // Predicated region
        $region97: #{ppo_loss.2} parent=91 // pred_check
          %p822 = pneg %p287
        $region98: #{ppo_loss.2} parent=91 // pred_check_branch
          %824 = sbr.rel (%p822) target = $region100
        $region99: #{ppo_loss.2} parent=91 // pred_region
          %p825 = scmp.lt.s32.totalorder %s35, 3
          %s826 = scalar_select %p825, %s35, 3
          %s827 = smul.addr %s826, 8
          %s828 = scalar_lea.vmem %s9, %s827
        $region100: #{ppo_loss.2} parent=91 // pred_fallthru
          _
      $region92: #{ppo_loss.2} parent=5 // pred_fallthru
        _
    $region6: #{ppo_loss.2} parent=1 // loop_footer
      %s33 = sadd.s32 1, %s29
    $region7: #{ppo_loss.2} parent=1 // loop_footer_branch
      %28 = sbr.rel target = $region3
    $region8: #{ppo_loss.2} parent=1 // loop_exit
      _
    %829 = vsyncpa [#allocation4], 1
    %s830 = scalar_lea.sflag [#allocation4], 1
    %831 = vsyncpa %s830, 1
    %832 = vsyncpa [#allocation6], 1
    %s833 = scalar_lea.sflag [#allocation6], 1
    %834 = vsyncpa %s833, 1
    %835 = vsyncpa [#allocation9], 1
    %s836 = scalar_lea.sflag [#allocation9], 1
    %837 = vsyncpa %s836, 1
    %838 = vsyncpa [#allocation12], 1
    %s839 = scalar_lea.sflag [#allocation12], 1
    %840 = vsyncpa %s839, 1

</llo_original>
